<compile_context>
chip_gen: v5e
topology: v5e:2x2
jax: 0.10.0
libtpu: 0.0.40
codegen_flags: <defaults>
</compile_context>

<pallas_src>
import numpy as np
import jax
import jax.numpy as jnp
from jax import lax
from jax.experimental import pallas as pl
from jax.experimental.pallas import tpu as pltpu

# ----------------------------- configuration -------------------------------
B = 2
IN_CH, OUT_CH = 8, 8              # UpBlock(in_channels=8, out_channels=8)
C_IN = IN_CH + OUT_CH             # ResidualBlock input channels  (16)
C_OUT = OUT_CH                    # ResidualBlock output channels (8)
H = W = 16
HW = H * W                        # 256 lanes -> lane-dense stores
LAG_DIM = 8
NOISE_DIM = 8
EPS = 1e-5                        # GroupNorm default eps

# packed-operand geometry
K1 = 9 * C_IN + C_IN              # 160: stage-1 im2col rows + shortcut rows
EMB_BIAS_COL = LAG_DIM + NOISE_DIM        # column holding the constant 1.0
# weight-slab row ranges
L1_R0, L1_R1 = 0, 2 * C_OUT               # (16, K1) fused [[W1t,0],[0,Ws]]
L2_R0, L2_R1 = L1_R1, L1_R1 + C_OUT       # (8,  K1) [W2t | 0]
WE_R0, WE_R1 = L2_R1, L2_R1 + 4 * C_OUT   # (32, K1) lag/noise dense (+bias col)
WSLAB_ROWS = WE_R1                        # 56
# param-column row ranges
PG2 = 2 * C_IN + 2 * C_OUT                # 48
PB2 = PG2 + C_OUT                         # 56
PCB2 = PB2 + C_OUT                        # 64
PCOL_ROWS = PCB2 + C_OUT                  # 72

assert W & (W - 1) == 0, "W must be a power of two for the lane-column mask"
assert HW % 128 == 0 and C_IN % 8 == 0 and C_OUT % 8 == 0


def _gelu(x):
    # tanh-approximate GELU (identical in kernel and reference)
    c = jnp.asarray(np.sqrt(2.0 / np.pi), x.dtype)
    return 0.5 * x * (1.0 + jnp.tanh(c * (x + 0.044715 * x * x * x)))


def _group_norm_gelu(a, gamma, beta):
    """GroupNorm(n_groups=1) + GELU over one (C, HW) sample, single-pass stats."""
    n = a.shape[0] * a.shape[1]
    s1 = jnp.sum(a, axis=(0, 1), keepdims=True)          # (1, 1)
    s2 = jnp.sum(a * a, axis=(0, 1), keepdims=True)      # (1, 1)
    mu = s1 / n
    var = s2 / n - mu * mu
    inv = lax.rsqrt(var + EPS)
    return _gelu((a - mu) * (inv * gamma) + beta)


def _write_circular_taps(a, taps_ref, c):
    """taps_ref[k*c:(k+1)*c] <- `a` circularly shifted by (1-ky, 1-kx), k=ky*3+kx.

    Factorized: the 3 column-shift variants (dx=+1,0,-1) are built once (main
    lane roll + one wrap fix-up select for dx=+-1); the 9 taps are then pure
    row shifts (flat lane rolls by multiples of W, no fix-up needed because
    the wrap-column masks are invariant under rolls by multiples of W).
    10 XLU rolls + 2 VPU selects per stage (previously 14 + 6).
    """
    col = lax.broadcasted_iota(jnp.int32, a.shape, 1) & (W - 1)   # lane's w idx
    first_col = col == 0
    last_col = col == (W - 1)

    cs_plus = jnp.where(first_col, pltpu.roll(a, (1 - W) % HW, axis=1),
                        pltpu.roll(a, 1, axis=1))                  # dx = +1
    cs_minus = jnp.where(last_col, pltpu.roll(a, W - 1, axis=1),
                         pltpu.roll(a, HW - 1, axis=1))            # dx = -1
    cs = {1: cs_plus, 0: a, -1: cs_minus}

    for ky in range(3):
        row_shift = ((1 - ky) * W) % HW
        for kx in range(3):
            tap = cs[1 - kx]
            if row_shift:
                tap = pltpu.roll(tap, row_shift, axis=1)
            k = ky * 3 + kx
            taps_ref[k * c:(k + 1) * c, :] = tap


# ------------------------------ Pallas kernel -------------------------------
def upblock_kernel(x_ref, emb_ref, wslab_ref, pcol_ref, y_ref, taps_ref):
    # unpack the two packed parameter operands (static, sublane-aligned slices)
    l1 = wslab_ref[L1_R0:L1_R1, :]        # (16, 160) fused conv1 (+) shortcut
    l2 = wslab_ref[L2_R0:L2_R1, :]        # (8, 160)  conv2 (cols >= 72 are zero)
    we = wslab_ref[WE_R0:WE_R1, :]        # (32, 160) lag/noise dense (+ bias col)

    g1 = pcol_ref[0:C_IN, :]
    be1 = pcol_ref[C_IN:2 * C_IN, :]
    b1bs = pcol_ref[2 * C_IN:2 * C_IN + 2 * C_OUT, :]     # [b1 ; bs]
    g2 = pcol_ref[PG2:PG2 + C_OUT, :]
    be2 = pcol_ref[PB2:PB2 + C_OUT, :]
    b2 = pcol_ref[PCB2:PCB2 + C_OUT, :]

    # Single grid step: the tiny batch is a static unrolled loop, so the
    # per-step + parameter-DMA overhead is paid exactly once.
    for b in range(B):
        x = x_ref[b]                                      # (C_IN, HW)
        emb = emb_ref[b]                                  # (1, 160) [delta|t|1|0]

        # all four lag/noise projections (incl. biases) in one pass
        proj = jnp.sum(we * emb, axis=1, keepdims=True)   # (32, 1)
        lag1 = proj[0:C_OUT]
        noi1 = proj[C_OUT:2 * C_OUT]
        lag2 = proj[2 * C_OUT:3 * C_OUT]
        noi2 = proj[3 * C_OUT:4 * C_OUT]

        # ---- stage 1: GN+GELU once, 9 circular taps + raw x -> ONE MXU matmul
        a1 = _group_norm_gelu(x, g1, be1)                 # (C_IN, HW)
        _write_circular_taps(a1, taps_ref, C_IN)          # rows 0..143
        taps_ref[9 * C_IN:K1, :] = x                      # shortcut sees raw x
        r1 = jnp.dot(l1, taps_ref[...],
                     preferred_element_type=jnp.float32) + b1bs   # (16, HW)
        h = _gelu(_gelu(r1[0:C_OUT] + lag1) + noi1)       # conv1 branch
        sc = r1[C_OUT:2 * C_OUT]                          # 1x1 shortcut, held

        # ---- stage 2: same scratch reused (rows 0..71 rewritten) -----------
        a2 = _group_norm_gelu(h, g2, be2)                 # (C_OUT, HW)
        _write_circular_taps(a2, taps_ref, C_OUT)         # rows 0..71
        # rows [72, 160) still hold finite stage-1 data; l2 is exactly zero
        # there, so the full-width dot is exact and avoids partial-lane slices.
        r2 = jnp.dot(l2, taps_ref[...],
                     preferred_element_type=jnp.float32) + b2     # (8, HW)
        y = _gelu(_gelu(r2 + lag2) + noi2)

        y_ref[b] = y + sc
        # UpBlock.attn is nn.Identity() (has_attn=False): nothing more to do.


# ------------------------- parameter packing (once) -------------------------
def pack_weights(p):
    """Pack every module parameter into two dense operands (done once)."""
    # im2col weight layout: W[k, ci, co] -> Wt[co, k*C + ci]
    w1t = jnp.transpose(p["W1"], (2, 0, 1)).reshape(C_OUT, 9 * C_IN)
    w2t = jnp.transpose(p["W2"], (2, 0, 1)).reshape(C_OUT, 9 * C_OUT)

    wslab = jnp.zeros((WSLAB_ROWS, K1), jnp.float32)
    # fused stage-1 LHS: rows 0..7 conv1, rows 8..15 shortcut (block diagonal)
    wslab = wslab.at[0:C_OUT, 0:9 * C_IN].set(w1t)
    wslab = wslab.at[C_OUT:2 * C_OUT, 9 * C_IN:K1].set(p["Ws"])
    # stage-2 LHS (zero-padded to the full slab width)
    wslab = wslab.at[L2_R0:L2_R1, 0:9 * C_OUT].set(w2t)
    # lag/noise dense weights + their biases in column EMB_BIAS_COL
    r = WE_R0
    wslab = wslab.at[r + 0 * C_OUT:r + 1 * C_OUT, 0:LAG_DIM].set(p["Wl1"])
    wslab = wslab.at[r + 0 * C_OUT:r + 1 * C_OUT, EMB_BIAS_COL].set(p["bl1"])
    wslab = wslab.at[r + 1 * C_OUT:r + 2 * C_OUT, LAG_DIM:EMB_BIAS_COL].set(p["Wn1"])
    wslab = wslab.at[r + 1 * C_OUT:r + 2 * C_OUT, EMB_BIAS_COL].set(p["bn1"])
    wslab = wslab.at[r + 2 * C_OUT:r + 3 * C_OUT, 0:LAG_DIM].set(p["Wl2"])
    wslab = wslab.at[r + 2 * C_OUT:r + 3 * C_OUT, EMB_BIAS_COL].set(p["bl2"])
    wslab = wslab.at[r + 3 * C_OUT:r + 4 * C_OUT, LAG_DIM:EMB_BIAS_COL].set(p["Wn2"])
    wslab = wslab.at[r + 3 * C_OUT:r + 4 * C_OUT, EMB_BIAS_COL].set(p["bn2"])

    pcol = jnp.concatenate([p["g1"], p["be1"], p["b1"], p["bs"],
                            p["g2"], p["be2"], p["b2"]]).reshape(-1, 1)
    pcol = pcol.astype(jnp.float32)
    assert pcol.shape == (PCOL_ROWS, 1)
    return wslab, pcol


# --------------------------------- forward ----------------------------------
def upblock_forward(x_nchw, delta, t, wslab, pcol):
    # NCHW with (H, W) flattened is already the channels-in-sublanes /
    # pixels-in-lanes (C, HW) layout the kernel wants -- no transpose needed.
    x2d = x_nchw.reshape(B, C_IN, HW)

    # per-sample embedding row [delta | t | 1 | zero-pad to the slab width]
    emb = jnp.zeros((B, 1, K1), jnp.float32)
    emb = emb.at[:, 0, 0:LAG_DIM].set(delta)
    emb = emb.at[:, 0, LAG_DIM:LAG_DIM + NOISE_DIM].set(t)
    emb = emb.at[:, 0, EMB_BIAS_COL].set(1.0)

    cost = pl.CostEstimate(
        flops=int(B * 2 * (2 * C_OUT + C_OUT) * K1 * HW),
        transcendentals=int(B * (HW * (C_IN + 5 * C_OUT) + 2)),
        bytes_accessed=int(4 * (x2d.size + emb.size + wslab.size + pcol.size
                                + B * C_OUT * HW)),
    )

    y2d = pl.pallas_call(
        upblock_kernel,
        out_shape=jax.ShapeDtypeStruct((B, C_OUT, HW), jnp.float32),
        # No grid: every (tiny) operand is mapped whole into VMEM -> one
        # launch and one DMA per operand; the batch is unrolled inside.
        scratch_shapes=[pltpu.VMEM((K1, HW), jnp.float32)],
        cost_estimate=cost,
    )(x2d, emb, wslab, pcol)

    return y2d.reshape(B, C_OUT, H, W)               # NCHW


# ------------------------ pure-JAX reference (checking) ---------------------
def _ref_forward(x_nchw, delta, t, p):
    x = jnp.transpose(x_nchw, (0, 2, 3, 1))          # NHWC

    def gn(a, gamma, beta):
        mu = a.mean(axis=(1, 2, 3), keepdims=True)
        var = ((a - mu) ** 2).mean(axis=(1, 2, 3), keepdims=True)
        return (a - mu) * lax.rsqrt(var + EPS) * gamma.reshape(1, 1, 1, -1) \
            + beta.reshape(1, 1, 1, -1)

    def circ_conv3(a, w9, b):
        w = w9.reshape(3, 3, w9.shape[1], w9.shape[2])   # HWIO
        ap = jnp.pad(a, ((0, 0), (1, 1), (1, 1), (0, 0)), mode="wrap")
        y = lax.conv_general_dilated(ap, w, (1, 1), "VALID",
                                     dimension_numbers=("NHWC", "HWIO", "NHWC"))
        return y + b.reshape(1, 1, 1, -1)

    def dense(v, w, b):                               # v:(B,IN), w:(OUT,IN)
        return v @ w.T + b

    h = circ_conv3(_gelu(gn(x, p["g1"], p["be1"])), p["W1"], p["b1"])
    h = _gelu(h + dense(delta, p["Wl1"], p["bl1"])[:, None, None, :])
    h = _gelu(h + dense(t, p["Wn1"], p["bn1"])[:, None, None, :])
    h2 = circ_conv3(_gelu(gn(h, p["g2"], p["be2"])), p["W2"], p["b2"])
    h2 = _gelu(h2 + dense(delta, p["Wl2"], p["bl2"])[:, None, None, :])
    h2 = _gelu(h2 + dense(t, p["Wn2"], p["bn2"])[:, None, None, :])
    sc = jnp.einsum("bhwc,oc->bhwo", x, p["Ws"]) + p["bs"].reshape(1, 1, 1, -1)
    return jnp.transpose(h2 + sc, (0, 3, 1, 2))       # back to NCHW (attn=Id)


# --------------------------------- main --------------------------------------
if __name__ == "__main__":
    key = jax.random.PRNGKey(0)
    ks = jax.random.split(key, 24)

    def rn(k, shape, scale=0.1):
        return (scale * jax.random.normal(k, shape)).astype(jnp.float32)

    params = {
        # conv1 / conv2 weights stored as (9, C_in, C_out): tap k = ky*3+kx
        "W1": rn(ks[0], (9, C_IN, C_OUT)),   "b1": rn(ks[1], (C_OUT,)),
        "W2": rn(ks[2], (9, C_OUT, C_OUT)),  "b2": rn(ks[3], (C_OUT,)),
        # 1x1 shortcut conv
        "Ws": rn(ks[4], (C_OUT, C_IN)),      "bs": rn(ks[5], (C_OUT,)),
        # GroupNorm affine params
        "g1": 1.0 + rn(ks[6], (C_IN,)),      "be1": rn(ks[7], (C_IN,)),
        "g2": 1.0 + rn(ks[8], (C_OUT,)),     "be2": rn(ks[9], (C_OUT,)),
        # lag / noise dense layers (PyTorch Linear convention: (out, in))
        "Wl1": rn(ks[10], (C_OUT, LAG_DIM)),   "bl1": rn(ks[11], (C_OUT,)),
        "Wl2": rn(ks[12], (C_OUT, LAG_DIM)),   "bl2": rn(ks[13], (C_OUT,)),
        "Wn1": rn(ks[14], (C_OUT, NOISE_DIM)), "bn1": rn(ks[15], (C_OUT,)),
        "Wn2": rn(ks[16], (C_OUT, NOISE_DIM)), "bn2": rn(ks[17], (C_OUT,)),
    }

    x = jax.random.normal(ks[18], (B, C_IN, H, W), dtype=jnp.float32)  # NCHW
    delta = jax.random.normal(ks[19], (B, LAG_DIM), dtype=jnp.float32)
    t = jax.random.normal(ks[20], (B, NOISE_DIM), dtype=jnp.float32)

    wslab, pcol = pack_weights(params)          # packed once, outside the jit

    fwd = jax.jit(upblock_forward)
    out = jax.block_until_ready(fwd(x, delta, t, wslab, pcol))

    ref = _ref_forward(x, delta, t, params)
    np.testing.assert_allclose(np.asarray(out), np.asarray(ref),
                               atol=2e-3, rtol=2e-3)
    print("KERNEL_OK")
</pallas_src>

<mosaic_0001>
module attributes {stable_mosaic.version = 11 : i64} {
  func.func @upblock_kernel(%arg0: memref<2x16x256xf32, #tpu.memory_space<vmem>>, %arg1: memref<2x1x160xf32, #tpu.memory_space<vmem>>, %arg2: memref<56x160xf32, #tpu.memory_space<vmem>>, %arg3: memref<72x1xf32, #tpu.memory_space<vmem>>, %arg4: memref<2x8x256xf32, #tpu.memory_space<vmem>>, %arg5: memref<160x256xf32, #tpu.memory_space<vmem>>) attributes {dimension_semantics = [], scalar_prefetch = 0 : i64, scratch_operands = 1 : i64, tpu.core_type = #tpu.core_type<tc>} {
    %c0 = arith.constant 0 : index
    %c0_0 = arith.constant 0 : index
    %0 = vector.load %arg2[%c0, %c0_0] : memref<56x160xf32, #tpu.memory_space<vmem>>, vector<16x160xf32>
    %c16 = arith.constant 16 : index
    %c0_1 = arith.constant 0 : index
    %1 = vector.load %arg2[%c16, %c0_1] : memref<56x160xf32, #tpu.memory_space<vmem>>, vector<8x160xf32>
    %c24 = arith.constant 24 : index
    %c0_2 = arith.constant 0 : index
    %2 = vector.load %arg2[%c24, %c0_2] : memref<56x160xf32, #tpu.memory_space<vmem>>, vector<32x160xf32>
    %c0_3 = arith.constant 0 : index
    %c0_4 = arith.constant 0 : index
    %3 = vector.load %arg3[%c0_3, %c0_4] : memref<72x1xf32, #tpu.memory_space<vmem>>, vector<16x1xf32>
    %c16_5 = arith.constant 16 : index
    %c0_6 = arith.constant 0 : index
    %4 = vector.load %arg3[%c16_5, %c0_6] : memref<72x1xf32, #tpu.memory_space<vmem>>, vector<16x1xf32>
    %c32 = arith.constant 32 : index
    %c0_7 = arith.constant 0 : index
    %5 = vector.load %arg3[%c32, %c0_7] : memref<72x1xf32, #tpu.memory_space<vmem>>, vector<16x1xf32>
    %c48 = arith.constant 48 : index
    %c0_8 = arith.constant 0 : index
    %6 = vector.load %arg3[%c48, %c0_8] : memref<72x1xf32, #tpu.memory_space<vmem>>, vector<8x1xf32>
    %c56 = arith.constant 56 : index
    %c0_9 = arith.constant 0 : index
    %7 = vector.load %arg3[%c56, %c0_9] : memref<72x1xf32, #tpu.memory_space<vmem>>, vector<8x1xf32>
    %c64 = arith.constant 64 : index
    %c0_10 = arith.constant 0 : index
    %8 = vector.load %arg3[%c64, %c0_10] : memref<72x1xf32, #tpu.memory_space<vmem>>, vector<8x1xf32>
    %c0_11 = arith.constant 0 : index
    %c0_12 = arith.constant 0 : index
    %c0_13 = arith.constant 0 : index
    %9 = vector.load %arg0[%c0_11, %c0_12, %c0_13] : memref<2x16x256xf32, #tpu.memory_space<vmem>>, vector<1x16x256xf32>
    %10 = vector.shape_cast %9 : vector<1x16x256xf32> to vector<16x256xf32>
    %c0_14 = arith.constant 0 : index
    %c0_15 = arith.constant 0 : index
    %c0_16 = arith.constant 0 : index
    %11 = vector.load %arg1[%c0_14, %c0_15, %c0_16] : memref<2x1x160xf32, #tpu.memory_space<vmem>>, vector<1x1x160xf32>
    %12 = vector.shape_cast %11 : vector<1x1x160xf32> to vector<1x160xf32>
    %13 = vector.broadcast %12 : vector<1x160xf32> to vector<32x160xf32>
    %14 = arith.mulf %2, %13 : vector<32x160xf32>
    %cst = arith.constant dense<0.000000e+00> : vector<32xf32>
    %15 = vector.multi_reduction <add>, %14, %cst [1] : vector<32x160xf32> to vector<32xf32>
    %16 = vector.shape_cast %15 : vector<32xf32> to vector<32x1xf32>
    %17 = vector.extract_strided_slice %16 {offsets = [0, 0], sizes = [8, 1], strides = [1, 1]} : vector<32x1xf32> to vector<8x1xf32>
    %18 = vector.extract_strided_slice %16 {offsets = [8, 0], sizes = [8, 1], strides = [1, 1]} : vector<32x1xf32> to vector<8x1xf32>
    %19 = vector.extract_strided_slice %16 {offsets = [16, 0], sizes = [8, 1], strides = [1, 1]} : vector<32x1xf32> to vector<8x1xf32>
    %20 = vector.extract_strided_slice %16 {offsets = [24, 0], sizes = [8, 1], strides = [1, 1]} : vector<32x1xf32> to vector<8x1xf32>
    %21 = vector.shape_cast %10 : vector<16x256xf32> to vector<1x16x256xf32>
    %cst_17 = arith.constant dense<0.000000e+00> : vector<1xf32>
    %22 = vector.multi_reduction <add>, %21, %cst_17 [1, 2] : vector<1x16x256xf32> to vector<1xf32>
    %23 = vector.shape_cast %22 : vector<1xf32> to vector<1x1x1xf32>
    %24 = vector.extract %23[0, 0, 0] : f32 from vector<1x1x1xf32>
    %25 = vector.broadcast %24 : f32 to vector<1x1xf32>
    %26 = arith.mulf %10, %10 : vector<16x256xf32>
    %27 = vector.shape_cast %26 : vector<16x256xf32> to vector<1x16x256xf32>
    %cst_18 = arith.constant dense<0.000000e+00> : vector<1xf32>
    %28 = vector.multi_reduction <add>, %27, %cst_18 [1, 2] : vector<1x16x256xf32> to vector<1xf32>
    %29 = vector.shape_cast %28 : vector<1xf32> to vector<1x1x1xf32>
    %30 = vector.extract %29[0, 0, 0] : f32 from vector<1x1x1xf32>
    %31 = vector.broadcast %30 : f32 to vector<1x1xf32>
    %cst_19 = arith.constant 4.096000e+03 : f32
    %32 = vector.broadcast %cst_19 : f32 to vector<1x1xf32>
    %33 = arith.divf %25, %32 : vector<1x1xf32>
    %cst_20 = arith.constant 4.096000e+03 : f32
    %34 = vector.broadcast %cst_20 : f32 to vector<1x1xf32>
    %35 = arith.divf %31, %34 : vector<1x1xf32>
    %36 = arith.mulf %33, %33 : vector<1x1xf32>
    %37 = arith.subf %35, %36 : vector<1x1xf32>
    %cst_21 = arith.constant 9.99999974E-6 : f32
    %38 = vector.broadcast %cst_21 : f32 to vector<1x1xf32>
    %39 = arith.addf %37, %38 : vector<1x1xf32>
    %40 = math.rsqrt %39 : vector<1x1xf32>
    %41 = vector.broadcast %33 : vector<1x1xf32> to vector<16x256xf32>
    %42 = arith.subf %10, %41 : vector<16x256xf32>
    %43 = vector.broadcast %40 : vector<1x1xf32> to vector<16x1xf32>
    %44 = arith.mulf %43, %3 : vector<16x1xf32>
    %45 = vector.broadcast %44 : vector<16x1xf32> to vector<16x256xf32>
    %46 = arith.mulf %42, %45 : vector<16x256xf32>
    %47 = vector.broadcast %4 : vector<16x1xf32> to vector<16x256xf32>
    %48 = arith.addf %46, %47 : vector<16x256xf32>
    %cst_22 = arith.constant 5.000000e-01 : f32
    %49 = vector.broadcast %cst_22 : f32 to vector<16x256xf32>
    %50 = arith.mulf %49, %48 : vector<16x256xf32>
    %cst_23 = arith.constant 4.471500e-02 : f32
    %51 = vector.broadcast %cst_23 : f32 to vector<16x256xf32>
    %52 = arith.mulf %51, %48 : vector<16x256xf32>
    %53 = arith.mulf %52, %48 : vector<16x256xf32>
    %54 = arith.mulf %53, %48 : vector<16x256xf32>
    %55 = arith.addf %48, %54 : vector<16x256xf32>
    %cst_24 = arith.constant 0.797884583 : f32
    %56 = vector.broadcast %cst_24 : f32 to vector<16x256xf32>
    %57 = arith.mulf %56, %55 : vector<16x256xf32>
    %58 = math.tanh %57 : vector<16x256xf32>
    %cst_25 = arith.constant 1.000000e+00 : f32
    %59 = vector.broadcast %cst_25 : f32 to vector<16x256xf32>
    %60 = arith.addf %59, %58 : vector<16x256xf32>
    %61 = arith.mulf %50, %60 : vector<16x256xf32>
    %62 = tpu.iota {dimensions = array<i32: 1>} : vector<16x256xi32>
    %c15_i32 = arith.constant 15 : i32
    %63 = vector.broadcast %c15_i32 : i32 to vector<16x256xi32>
    %64 = arith.andi %62, %63 : vector<16x256xi32>
    %c0_i32 = arith.constant 0 : i32
    %65 = vector.broadcast %c0_i32 : i32 to vector<16x256xi32>
    %66 = arith.cmpi eq, %64, %65 : vector<16x256xi32>
    %c15_i32_26 = arith.constant 15 : i32
    %67 = vector.broadcast %c15_i32_26 : i32 to vector<16x256xi32>
    %68 = arith.cmpi eq, %64, %67 : vector<16x256xi32>
    %c241_i32 = arith.constant 241 : i32
    %69 = tpu.dynamic_rotate %61 by %c241_i32 dim 1 : vector<16x256xf32>, i32 -> vector<16x256xf32>
    %c1_i32 = arith.constant 1 : i32
    %70 = tpu.dynamic_rotate %61 by %c1_i32 dim 1 : vector<16x256xf32>, i32 -> vector<16x256xf32>
    %71 = arith.select %66, %69, %70 : vector<16x256xi1>, vector<16x256xf32>
    %c15_i32_27 = arith.constant 15 : i32
    %72 = tpu.dynamic_rotate %61 by %c15_i32_27 dim 1 : vector<16x256xf32>, i32 -> vector<16x256xf32>
    %c255_i32 = arith.constant 255 : i32
    %73 = tpu.dynamic_rotate %61 by %c255_i32 dim 1 : vector<16x256xf32>, i32 -> vector<16x256xf32>
    %74 = arith.select %68, %72, %73 : vector<16x256xi1>, vector<16x256xf32>
    %c16_i32 = arith.constant 16 : i32
    %75 = tpu.dynamic_rotate %71 by %c16_i32 dim 1 : vector<16x256xf32>, i32 -> vector<16x256xf32>
    %c0_28 = arith.constant 0 : index
    %c0_29 = arith.constant 0 : index
    %76 = vector.load %arg5[%c0_28, %c0_29] : memref<160x256xf32, #tpu.memory_space<vmem>>, vector<16x256xf32>
    tpu.vector_store %arg5[%c0_28, %c0_29], %75 {strides = array<i32>} : memref<160x256xf32, #tpu.memory_space<vmem>>, vector<16x256xf32>,
    %c16_i32_30 = arith.constant 16 : i32
    %77 = tpu.dynamic_rotate %61 by %c16_i32_30 dim 1 : vector<16x256xf32>, i32 -> vector<16x256xf32>
    %c16_31 = arith.constant 16 : index
    %c0_32 = arith.constant 0 : index
    %78 = vector.load %arg5[%c16_31, %c0_32] : memref<160x256xf32, #tpu.memory_space<vmem>>, vector<16x256xf32>
    tpu.vector_store %arg5[%c16_31, %c0_32], %77 {strides = array<i32>} : memref<160x256xf32, #tpu.memory_space<vmem>>, vector<16x256xf32>,
    %c16_i32_33 = arith.constant 16 : i32
    %79 = tpu.dynamic_rotate %74 by %c16_i32_33 dim 1 : vector<16x256xf32>, i32 -> vector<16x256xf32>
    %c32_34 = arith.constant 32 : index
    %c0_35 = arith.constant 0 : index
    %80 = vector.load %arg5[%c32_34, %c0_35] : memref<160x256xf32, #tpu.memory_space<vmem>>, vector<16x256xf32>
    tpu.vector_store %arg5[%c32_34, %c0_35], %79 {strides = array<i32>} : memref<160x256xf32, #tpu.memory_space<vmem>>, vector<16x256xf32>,
    %c48_36 = arith.constant 48 : index
    %c0_37 = arith.constant 0 : index
    %81 = vector.load %arg5[%c48_36, %c0_37] : memref<160x256xf32, #tpu.memory_space<vmem>>, vector<16x256xf32>
    tpu.vector_store %arg5[%c48_36, %c0_37], %71 {strides = array<i32>} : memref<160x256xf32, #tpu.memory_space<vmem>>, vector<16x256xf32>,
    %c64_38 = arith.constant 64 : index
    %c0_39 = arith.constant 0 : index
    %82 = vector.load %arg5[%c64_38, %c0_39] : memref<160x256xf32, #tpu.memory_space<vmem>>, vector<16x256xf32>
    tpu.vector_store %arg5[%c64_38, %c0_39], %61 {strides = array<i32>} : memref<160x256xf32, #tpu.memory_space<vmem>>, vector<16x256xf32>,
    %c80 = arith.constant 80 : index
    %c0_40 = arith.constant 0 : index
    %83 = vector.load %arg5[%c80, %c0_40] : memref<160x256xf32, #tpu.memory_space<vmem>>, vector<16x256xf32>
    tpu.vector_store %arg5[%c80, %c0_40], %74 {strides = array<i32>} : memref<160x256xf32, #tpu.memory_space<vmem>>, vector<16x256xf32>,
    %c240_i32 = arith.constant 240 : i32
    %84 = tpu.dynamic_rotate %71 by %c240_i32 dim 1 : vector<16x256xf32>, i32 -> vector<16x256xf32>
    %c96 = arith.constant 96 : index
    %c0_41 = arith.constant 0 : index
    %85 = vector.load %arg5[%c96, %c0_41] : memref<160x256xf32, #tpu.memory_space<vmem>>, vector<16x256xf32>
    tpu.vector_store %arg5[%c96, %c0_41], %84 {strides = array<i32>} : memref<160x256xf32, #tpu.memory_space<vmem>>, vector<16x256xf32>,
    %c240_i32_42 = arith.constant 240 : i32
    %86 = tpu.dynamic_rotate %61 by %c240_i32_42 dim 1 : vector<16x256xf32>, i32 -> vector<16x256xf32>
    %c112 = arith.constant 112 : index
    %c0_43 = arith.constant 0 : index
    %87 = vector.load %arg5[%c112, %c0_43] : memref<160x256xf32, #tpu.memory_space<vmem>>, vector<16x256xf32>
    tpu.vector_store %arg5[%c112, %c0_43], %86 {strides = array<i32>} : memref<160x256xf32, #tpu.memory_space<vmem>>, vector<16x256xf32>,
    %c240_i32_44 = arith.constant 240 : i32
    %88 = tpu.dynamic_rotate %74 by %c240_i32_44 dim 1 : vector<16x256xf32>, i32 -> vector<16x256xf32>
    %c128 = arith.constant 128 : index
    %c0_45 = arith.constant 0 : index
    %89 = vector.load %arg5[%c128, %c0_45] : memref<160x256xf32, #tpu.memory_space<vmem>>, vector<16x256xf32>
    tpu.vector_store %arg5[%c128, %c0_45], %88 {strides = array<i32>} : memref<160x256xf32, #tpu.memory_space<vmem>>, vector<16x256xf32>,
    %c144 = arith.constant 144 : index
    %c0_46 = arith.constant 0 : index
    %90 = vector.load %arg5[%c144, %c0_46] : memref<160x256xf32, #tpu.memory_space<vmem>>, vector<16x256xf32>
    tpu.vector_store %arg5[%c144, %c0_46], %10 {strides = array<i32>} : memref<160x256xf32, #tpu.memory_space<vmem>>, vector<16x256xf32>,
    %c0_47 = arith.constant 0 : index
    %c0_48 = arith.constant 0 : index
    %91 = vector.load %arg5[%c0_47, %c0_48] : memref<160x256xf32, #tpu.memory_space<vmem>>, vector<160x256xf32>
    %cst_49 = arith.constant dense<0.000000e+00> : vector<16x256xf32>
    %92 = tpu.matmul %0, %91, %cst_49 {dimension_numbers = #tpu.dot_dimension_numbers<[1], [0], [0], [1], [0, 0, 1, 1], [], []>} : vector<16x160xf32>, vector<160x256xf32>, vector<16x256xf32> -> vector<16x256xf32>
    %93 = vector.broadcast %5 : vector<16x1xf32> to vector<16x256xf32>
    %94 = arith.addf %92, %93 : vector<16x256xf32>
    %95 = vector.extract_strided_slice %94 {offsets = [0, 0], sizes = [8, 256], strides = [1, 1]} : vector<16x256xf32> to vector<8x256xf32>
    %96 = vector.broadcast %17 : vector<8x1xf32> to vector<8x256xf32>
    %97 = arith.addf %95, %96 : vector<8x256xf32>
    %cst_50 = arith.constant 5.000000e-01 : f32
    %98 = vector.broadcast %cst_50 : f32 to vector<8x256xf32>
    %99 = arith.mulf %98, %97 : vector<8x256xf32>
    %cst_51 = arith.constant 4.471500e-02 : f32
    %100 = vector.broadcast %cst_51 : f32 to vector<8x256xf32>
    %101 = arith.mulf %100, %97 : vector<8x256xf32>
    %102 = arith.mulf %101, %97 : vector<8x256xf32>
    %103 = arith.mulf %102, %97 : vector<8x256xf32>
    %104 = arith.addf %97, %103 : vector<8x256xf32>
    %cst_52 = arith.constant 0.797884583 : f32
    %105 = vector.broadcast %cst_52 : f32 to vector<8x256xf32>
    %106 = arith.mulf %105, %104 : vector<8x256xf32>
    %107 = math.tanh %106 : vector<8x256xf32>
    %cst_53 = arith.constant 1.000000e+00 : f32
    %108 = vector.broadcast %cst_53 : f32 to vector<8x256xf32>
    %109 = arith.addf %108, %107 : vector<8x256xf32>
    %110 = arith.mulf %99, %109 : vector<8x256xf32>
    %111 = vector.broadcast %18 : vector<8x1xf32> to vector<8x256xf32>
    %112 = arith.addf %110, %111 : vector<8x256xf32>
    %cst_54 = arith.constant 5.000000e-01 : f32
    %113 = vector.broadcast %cst_54 : f32 to vector<8x256xf32>
    %114 = arith.mulf %113, %112 : vector<8x256xf32>
    %cst_55 = arith.constant 4.471500e-02 : f32
    %115 = vector.broadcast %cst_55 : f32 to vector<8x256xf32>
    %116 = arith.mulf %115, %112 : vector<8x256xf32>
    %117 = arith.mulf %116, %112 : vector<8x256xf32>
    %118 = arith.mulf %117, %112 : vector<8x256xf32>
    %119 = arith.addf %112, %118 : vector<8x256xf32>
    %cst_56 = arith.constant 0.797884583 : f32
    %120 = vector.broadcast %cst_56 : f32 to vector<8x256xf32>
    %121 = arith.mulf %120, %119 : vector<8x256xf32>
    %122 = math.tanh %121 : vector<8x256xf32>
    %cst_57 = arith.constant 1.000000e+00 : f32
    %123 = vector.broadcast %cst_57 : f32 to vector<8x256xf32>
    %124 = arith.addf %123, %122 : vector<8x256xf32>
    %125 = arith.mulf %114, %124 : vector<8x256xf32>
    %126 = vector.extract_strided_slice %94 {offsets = [8, 0], sizes = [8, 256], strides = [1, 1]} : vector<16x256xf32> to vector<8x256xf32>
    %127 = vector.shape_cast %125 : vector<8x256xf32> to vector<1x8x256xf32>
    %cst_58 = arith.constant dense<0.000000e+00> : vector<1xf32>
    %128 = vector.multi_reduction <add>, %127, %cst_58 [1, 2] : vector<1x8x256xf32> to vector<1xf32>
    %129 = vector.shape_cast %128 : vector<1xf32> to vector<1x1x1xf32>
    %130 = vector.extract %129[0, 0, 0] : f32 from vector<1x1x1xf32>
    %131 = vector.broadcast %130 : f32 to vector<1x1xf32>
    %132 = arith.mulf %125, %125 : vector<8x256xf32>
    %133 = vector.shape_cast %132 : vector<8x256xf32> to vector<1x8x256xf32>
    %cst_59 = arith.constant dense<0.000000e+00> : vector<1xf32>
    %134 = vector.multi_reduction <add>, %133, %cst_59 [1, 2] : vector<1x8x256xf32> to vector<1xf32>
    %135 = vector.shape_cast %134 : vector<1xf32> to vector<1x1x1xf32>
    %136 = vector.extract %135[0, 0, 0] : f32 from vector<1x1x1xf32>
    %137 = vector.broadcast %136 : f32 to vector<1x1xf32>
    %cst_60 = arith.constant 2.048000e+03 : f32
    %138 = vector.broadcast %cst_60 : f32 to vector<1x1xf32>
    %139 = arith.divf %131, %138 : vector<1x1xf32>
    %cst_61 = arith.constant 2.048000e+03 : f32
    %140 = vector.broadcast %cst_61 : f32 to vector<1x1xf32>
    %141 = arith.divf %137, %140 : vector<1x1xf32>
    %142 = arith.mulf %139, %139 : vector<1x1xf32>
    %143 = arith.subf %141, %142 : vector<1x1xf32>
    %cst_62 = arith.constant 9.99999974E-6 : f32
    %144 = vector.broadcast %cst_62 : f32 to vector<1x1xf32>
    %145 = arith.addf %143, %144 : vector<1x1xf32>
    %146 = math.rsqrt %145 : vector<1x1xf32>
    %147 = vector.broadcast %139 : vector<1x1xf32> to vector<8x256xf32>
    %148 = arith.subf %125, %147 : vector<8x256xf32>
    %149 = vector.broadcast %146 : vector<1x1xf32> to vector<8x1xf32>
    %150 = arith.mulf %149, %6 : vector<8x1xf32>
    %151 = vector.broadcast %150 : vector<8x1xf32> to vector<8x256xf32>
    %152 = arith.mulf %148, %151 : vector<8x256xf32>
    %153 = vector.broadcast %7 : vector<8x1xf32> to vector<8x256xf32>
    %154 = arith.addf %152, %153 : vector<8x256xf32>
    %cst_63 = arith.constant 5.000000e-01 : f32
    %155 = vector.broadcast %cst_63 : f32 to vector<8x256xf32>
    %156 = arith.mulf %155, %154 : vector<8x256xf32>
    %cst_64 = arith.constant 4.471500e-02 : f32
    %157 = vector.broadcast %cst_64 : f32 to vector<8x256xf32>
    %158 = arith.mulf %157, %154 : vector<8x256xf32>
    %159 = arith.mulf %158, %154 : vector<8x256xf32>
    %160 = arith.mulf %159, %154 : vector<8x256xf32>
    %161 = arith.addf %154, %160 : vector<8x256xf32>
    %cst_65 = arith.constant 0.797884583 : f32
    %162 = vector.broadcast %cst_65 : f32 to vector<8x256xf32>
    %163 = arith.mulf %162, %161 : vector<8x256xf32>
    %164 = math.tanh %163 : vector<8x256xf32>
    %cst_66 = arith.constant 1.000000e+00 : f32
    %165 = vector.broadcast %cst_66 : f32 to vector<8x256xf32>
    %166 = arith.addf %165, %164 : vector<8x256xf32>
    %167 = arith.mulf %156, %166 : vector<8x256xf32>
    %168 = tpu.iota {dimensions = array<i32: 1>} : vector<8x256xi32>
    %c15_i32_67 = arith.constant 15 : i32
    %169 = vector.broadcast %c15_i32_67 : i32 to vector<8x256xi32>
    %170 = arith.andi %168, %169 : vector<8x256xi32>
    %c0_i32_68 = arith.constant 0 : i32
    %171 = vector.broadcast %c0_i32_68 : i32 to vector<8x256xi32>
    %172 = arith.cmpi eq, %170, %171 : vector<8x256xi32>
    %c15_i32_69 = arith.constant 15 : i32
    %173 = vector.broadcast %c15_i32_69 : i32 to vector<8x256xi32>
    %174 = arith.cmpi eq, %170, %173 : vector<8x256xi32>
    %c241_i32_70 = arith.constant 241 : i32
    %175 = tpu.dynamic_rotate %167 by %c241_i32_70 dim 1 : vector<8x256xf32>, i32 -> vector<8x256xf32>
    %c1_i32_71 = arith.constant 1 : i32
    %176 = tpu.dynamic_rotate %167 by %c1_i32_71 dim 1 : vector<8x256xf32>, i32 -> vector<8x256xf32>
    %177 = arith.select %172, %175, %176 : vector<8x256xi1>, vector<8x256xf32>
    %c15_i32_72 = arith.constant 15 : i32
    %178 = tpu.dynamic_rotate %167 by %c15_i32_72 dim 1 : vector<8x256xf32>, i32 -> vector<8x256xf32>
    %c255_i32_73 = arith.constant 255 : i32
    %179 = tpu.dynamic_rotate %167 by %c255_i32_73 dim 1 : vector<8x256xf32>, i32 -> vector<8x256xf32>
    %180 = arith.select %174, %178, %179 : vector<8x256xi1>, vector<8x256xf32>
    %c16_i32_74 = arith.constant 16 : i32
    %181 = tpu.dynamic_rotate %177 by %c16_i32_74 dim 1 : vector<8x256xf32>, i32 -> vector<8x256xf32>
    %c0_75 = arith.constant 0 : index
    %c0_76 = arith.constant 0 : index
    %182 = vector.load %arg5[%c0_75, %c0_76] : memref<160x256xf32, #tpu.memory_space<vmem>>, vector<8x256xf32>
    tpu.vector_store %arg5[%c0_75, %c0_76], %181 {strides = array<i32>} : memref<160x256xf32, #tpu.memory_space<vmem>>, vector<8x256xf32>,
    %c16_i32_77 = arith.constant 16 : i32
    %183 = tpu.dynamic_rotate %167 by %c16_i32_77 dim 1 : vector<8x256xf32>, i32 -> vector<8x256xf32>
    %c8 = arith.constant 8 : index
    %c0_78 = arith.constant 0 : index
    %184 = vector.load %arg5[%c8, %c0_78] : memref<160x256xf32, #tpu.memory_space<vmem>>, vector<8x256xf32>
    tpu.vector_store %arg5[%c8, %c0_78], %183 {strides = array<i32>} : memref<160x256xf32, #tpu.memory_space<vmem>>, vector<8x256xf32>,
    %c16_i32_79 = arith.constant 16 : i32
    %185 = tpu.dynamic_rotate %180 by %c16_i32_79 dim 1 : vector<8x256xf32>, i32 -> vector<8x256xf32>
    %c16_80 = arith.constant 16 : index
    %c0_81 = arith.constant 0 : index
    %186 = vector.load %arg5[%c16_80, %c0_81] : memref<160x256xf32, #tpu.memory_space<vmem>>, vector<8x256xf32>
    tpu.vector_store %arg5[%c16_80, %c0_81], %185 {strides = array<i32>} : memref<160x256xf32, #tpu.memory_space<vmem>>, vector<8x256xf32>,
    %c24_82 = arith.constant 24 : index
    %c0_83 = arith.constant 0 : index
    %187 = vector.load %arg5[%c24_82, %c0_83] : memref<160x256xf32, #tpu.memory_space<vmem>>, vector<8x256xf32>
    tpu.vector_store %arg5[%c24_82, %c0_83], %177 {strides = array<i32>} : memref<160x256xf32, #tpu.memory_space<vmem>>, vector<8x256xf32>,
    %c32_84 = arith.constant 32 : index
    %c0_85 = arith.constant 0 : index
    %188 = vector.load %arg5[%c32_84, %c0_85] : memref<160x256xf32, #tpu.memory_space<vmem>>, vector<8x256xf32>
    tpu.vector_store %arg5[%c32_84, %c0_85], %167 {strides = array<i32>} : memref<160x256xf32, #tpu.memory_space<vmem>>, vector<8x256xf32>,
    %c40 = arith.constant 40 : index
    %c0_86 = arith.constant 0 : index
    %189 = vector.load %arg5[%c40, %c0_86] : memref<160x256xf32, #tpu.memory_space<vmem>>, vector<8x256xf32>
    tpu.vector_store %arg5[%c40, %c0_86], %180 {strides = array<i32>} : memref<160x256xf32, #tpu.memory_space<vmem>>, vector<8x256xf32>,
    %c240_i32_87 = arith.constant 240 : i32
    %190 = tpu.dynamic_rotate %177 by %c240_i32_87 dim 1 : vector<8x256xf32>, i32 -> vector<8x256xf32>
    %c48_88 = arith.constant 48 : index
    %c0_89 = arith.constant 0 : index
    %191 = vector.load %arg5[%c48_88, %c0_89] : memref<160x256xf32, #tpu.memory_space<vmem>>, vector<8x256xf32>
    tpu.vector_store %arg5[%c48_88, %c0_89], %190 {strides = array<i32>} : memref<160x256xf32, #tpu.memory_space<vmem>>, vector<8x256xf32>,
    %c240_i32_90 = arith.constant 240 : i32
    %192 = tpu.dynamic_rotate %167 by %c240_i32_90 dim 1 : vector<8x256xf32>, i32 -> vector<8x256xf32>
    %c56_91 = arith.constant 56 : index
    %c0_92 = arith.constant 0 : index
    %193 = vector.load %arg5[%c56_91, %c0_92] : memref<160x256xf32, #tpu.memory_space<vmem>>, vector<8x256xf32>
    tpu.vector_store %arg5[%c56_91, %c0_92], %192 {strides = array<i32>} : memref<160x256xf32, #tpu.memory_space<vmem>>, vector<8x256xf32>,
    %c240_i32_93 = arith.constant 240 : i32
    %194 = tpu.dynamic_rotate %180 by %c240_i32_93 dim 1 : vector<8x256xf32>, i32 -> vector<8x256xf32>
    %c64_94 = arith.constant 64 : index
    %c0_95 = arith.constant 0 : index
    %195 = vector.load %arg5[%c64_94, %c0_95] : memref<160x256xf32, #tpu.memory_space<vmem>>, vector<8x256xf32>
    tpu.vector_store %arg5[%c64_94, %c0_95], %194 {strides = array<i32>} : memref<160x256xf32, #tpu.memory_space<vmem>>, vector<8x256xf32>,
    %c0_96 = arith.constant 0 : index
    %c0_97 = arith.constant 0 : index
    %196 = vector.load %arg5[%c0_96, %c0_97] : memref<160x256xf32, #tpu.memory_space<vmem>>, vector<160x256xf32>
    %cst_98 = arith.constant dense<0.000000e+00> : vector<8x256xf32>
    %197 = tpu.matmul %1, %196, %cst_98 {dimension_numbers = #tpu.dot_dimension_numbers<[1], [0], [0], [1], [0, 0, 1, 1], [], []>} : vector<8x160xf32>, vector<160x256xf32>, vector<8x256xf32> -> vector<8x256xf32>
    %198 = vector.broadcast %8 : vector<8x1xf32> to vector<8x256xf32>
    %199 = arith.addf %197, %198 : vector<8x256xf32>
    %200 = vector.broadcast %19 : vector<8x1xf32> to vector<8x256xf32>
    %201 = arith.addf %199, %200 : vector<8x256xf32>
    %cst_99 = arith.constant 5.000000e-01 : f32
    %202 = vector.broadcast %cst_99 : f32 to vector<8x256xf32>
    %203 = arith.mulf %202, %201 : vector<8x256xf32>
    %cst_100 = arith.constant 4.471500e-02 : f32
    %204 = vector.broadcast %cst_100 : f32 to vector<8x256xf32>
    %205 = arith.mulf %204, %201 : vector<8x256xf32>
    %206 = arith.mulf %205, %201 : vector<8x256xf32>
    %207 = arith.mulf %206, %201 : vector<8x256xf32>
    %208 = arith.addf %201, %207 : vector<8x256xf32>
    %cst_101 = arith.constant 0.797884583 : f32
    %209 = vector.broadcast %cst_101 : f32 to vector<8x256xf32>
    %210 = arith.mulf %209, %208 : vector<8x256xf32>
    %211 = math.tanh %210 : vector<8x256xf32>
    %cst_102 = arith.constant 1.000000e+00 : f32
    %212 = vector.broadcast %cst_102 : f32 to vector<8x256xf32>
    %213 = arith.addf %212, %211 : vector<8x256xf32>
    %214 = arith.mulf %203, %213 : vector<8x256xf32>
    %215 = vector.broadcast %20 : vector<8x1xf32> to vector<8x256xf32>
    %216 = arith.addf %214, %215 : vector<8x256xf32>
    %cst_103 = arith.constant 5.000000e-01 : f32
    %217 = vector.broadcast %cst_103 : f32 to vector<8x256xf32>
    %218 = arith.mulf %217, %216 : vector<8x256xf32>
    %cst_104 = arith.constant 4.471500e-02 : f32
    %219 = vector.broadcast %cst_104 : f32 to vector<8x256xf32>
    %220 = arith.mulf %219, %216 : vector<8x256xf32>
    %221 = arith.mulf %220, %216 : vector<8x256xf32>
    %222 = arith.mulf %221, %216 : vector<8x256xf32>
    %223 = arith.addf %216, %222 : vector<8x256xf32>
    %cst_105 = arith.constant 0.797884583 : f32
    %224 = vector.broadcast %cst_105 : f32 to vector<8x256xf32>
    %225 = arith.mulf %224, %223 : vector<8x256xf32>
    %226 = math.tanh %225 : vector<8x256xf32>
    %cst_106 = arith.constant 1.000000e+00 : f32
    %227 = vector.broadcast %cst_106 : f32 to vector<8x256xf32>
    %228 = arith.addf %227, %226 : vector<8x256xf32>
    %229 = arith.mulf %218, %228 : vector<8x256xf32>
    %230 = arith.addf %229, %126 : vector<8x256xf32>
    %c0_107 = arith.constant 0 : index
    %c0_108 = arith.constant 0 : index
    %c0_109 = arith.constant 0 : index
    %231 = vector.load %arg4[%c0_107, %c0_108, %c0_109] : memref<2x8x256xf32, #tpu.memory_space<vmem>>, vector<1x8x256xf32>
    %232 = vector.shape_cast %231 : vector<1x8x256xf32> to vector<8x256xf32>
    %233 = vector.shape_cast %230 : vector<8x256xf32> to vector<1x8x256xf32>
    tpu.vector_store %arg4[%c0_107, %c0_108, %c0_109], %233 {strides = array<i32>} : memref<2x8x256xf32, #tpu.memory_space<vmem>>, vector<1x8x256xf32>,
    %c1 = arith.constant 1 : index
    %c0_110 = arith.constant 0 : index
    %c0_111 = arith.constant 0 : index
    %234 = vector.load %arg0[%c1, %c0_110, %c0_111] : memref<2x16x256xf32, #tpu.memory_space<vmem>>, vector<1x16x256xf32>
    %235 = vector.shape_cast %234 : vector<1x16x256xf32> to vector<16x256xf32>
    %c1_112 = arith.constant 1 : index
    %c0_113 = arith.constant 0 : index
    %c0_114 = arith.constant 0 : index
    %236 = vector.load %arg1[%c1_112, %c0_113, %c0_114] : memref<2x1x160xf32, #tpu.memory_space<vmem>>, vector<1x1x160xf32>
    %237 = vector.shape_cast %236 : vector<1x1x160xf32> to vector<1x160xf32>
    %238 = vector.broadcast %237 : vector<1x160xf32> to vector<32x160xf32>
    %239 = arith.mulf %2, %238 : vector<32x160xf32>
    %cst_115 = arith.constant dense<0.000000e+00> : vector<32xf32>
    %240 = vector.multi_reduction <add>, %239, %cst_115 [1] : vector<32x160xf32> to vector<32xf32>
    %241 = vector.shape_cast %240 : vector<32xf32> to vector<32x1xf32>
    %242 = vector.extract_strided_slice %241 {offsets = [0, 0], sizes = [8, 1], strides = [1, 1]} : vector<32x1xf32> to vector<8x1xf32>
    %243 = vector.extract_strided_slice %241 {offsets = [8, 0], sizes = [8, 1], strides = [1, 1]} : vector<32x1xf32> to vector<8x1xf32>
    %244 = vector.extract_strided_slice %241 {offsets = [16, 0], sizes = [8, 1], strides = [1, 1]} : vector<32x1xf32> to vector<8x1xf32>
    %245 = vector.extract_strided_slice %241 {offsets = [24, 0], sizes = [8, 1], strides = [1, 1]} : vector<32x1xf32> to vector<8x1xf32>
    %246 = vector.shape_cast %235 : vector<16x256xf32> to vector<1x16x256xf32>
    %cst_116 = arith.constant dense<0.000000e+00> : vector<1xf32>
    %247 = vector.multi_reduction <add>, %246, %cst_116 [1, 2] : vector<1x16x256xf32> to vector<1xf32>
    %248 = vector.shape_cast %247 : vector<1xf32> to vector<1x1x1xf32>
    %249 = vector.extract %248[0, 0, 0] : f32 from vector<1x1x1xf32>
    %250 = vector.broadcast %249 : f32 to vector<1x1xf32>
    %251 = arith.mulf %235, %235 : vector<16x256xf32>
    %252 = vector.shape_cast %251 : vector<16x256xf32> to vector<1x16x256xf32>
    %cst_117 = arith.constant dense<0.000000e+00> : vector<1xf32>
    %253 = vector.multi_reduction <add>, %252, %cst_117 [1, 2] : vector<1x16x256xf32> to vector<1xf32>
    %254 = vector.shape_cast %253 : vector<1xf32> to vector<1x1x1xf32>
    %255 = vector.extract %254[0, 0, 0] : f32 from vector<1x1x1xf32>
    %256 = vector.broadcast %255 : f32 to vector<1x1xf32>
    %cst_118 = arith.constant 4.096000e+03 : f32
    %257 = vector.broadcast %cst_118 : f32 to vector<1x1xf32>
    %258 = arith.divf %250, %257 : vector<1x1xf32>
    %cst_119 = arith.constant 4.096000e+03 : f32
    %259 = vector.broadcast %cst_119 : f32 to vector<1x1xf32>
    %260 = arith.divf %256, %259 : vector<1x1xf32>
    %261 = arith.mulf %258, %258 : vector<1x1xf32>
    %262 = arith.subf %260, %261 : vector<1x1xf32>
    %cst_120 = arith.constant 9.99999974E-6 : f32
    %263 = vector.broadcast %cst_120 : f32 to vector<1x1xf32>
    %264 = arith.addf %262, %263 : vector<1x1xf32>
    %265 = math.rsqrt %264 : vector<1x1xf32>
    %266 = vector.broadcast %258 : vector<1x1xf32> to vector<16x256xf32>
    %267 = arith.subf %235, %266 : vector<16x256xf32>
    %268 = vector.broadcast %265 : vector<1x1xf32> to vector<16x1xf32>
    %269 = arith.mulf %268, %3 : vector<16x1xf32>
    %270 = vector.broadcast %269 : vector<16x1xf32> to vector<16x256xf32>
    %271 = arith.mulf %267, %270 : vector<16x256xf32>
    %272 = vector.broadcast %4 : vector<16x1xf32> to vector<16x256xf32>
    %273 = arith.addf %271, %272 : vector<16x256xf32>
    %cst_121 = arith.constant 5.000000e-01 : f32
    %274 = vector.broadcast %cst_121 : f32 to vector<16x256xf32>
    %275 = arith.mulf %274, %273 : vector<16x256xf32>
    %cst_122 = arith.constant 4.471500e-02 : f32
    %276 = vector.broadcast %cst_122 : f32 to vector<16x256xf32>
    %277 = arith.mulf %276, %273 : vector<16x256xf32>
    %278 = arith.mulf %277, %273 : vector<16x256xf32>
    %279 = arith.mulf %278, %273 : vector<16x256xf32>
    %280 = arith.addf %273, %279 : vector<16x256xf32>
    %cst_123 = arith.constant 0.797884583 : f32
    %281 = vector.broadcast %cst_123 : f32 to vector<16x256xf32>
    %282 = arith.mulf %281, %280 : vector<16x256xf32>
    %283 = math.tanh %282 : vector<16x256xf32>
    %cst_124 = arith.constant 1.000000e+00 : f32
    %284 = vector.broadcast %cst_124 : f32 to vector<16x256xf32>
    %285 = arith.addf %284, %283 : vector<16x256xf32>
    %286 = arith.mulf %275, %285 : vector<16x256xf32>
    %287 = tpu.iota {dimensions = array<i32: 1>} : vector<16x256xi32>
    %c15_i32_125 = arith.constant 15 : i32
    %288 = vector.broadcast %c15_i32_125 : i32 to vector<16x256xi32>
    %289 = arith.andi %287, %288 : vector<16x256xi32>
    %c0_i32_126 = arith.constant 0 : i32
    %290 = vector.broadcast %c0_i32_126 : i32 to vector<16x256xi32>
    %291 = arith.cmpi eq, %289, %290 : vector<16x256xi32>
    %c15_i32_127 = arith.constant 15 : i32
    %292 = vector.broadcast %c15_i32_127 : i32 to vector<16x256xi32>
    %293 = arith.cmpi eq, %289, %292 : vector<16x256xi32>
    %c241_i32_128 = arith.constant 241 : i32
    %294 = tpu.dynamic_rotate %286 by %c241_i32_128 dim 1 : vector<16x256xf32>, i32 -> vector<16x256xf32>
    %c1_i32_129 = arith.constant 1 : i32
    %295 = tpu.dynamic_rotate %286 by %c1_i32_129 dim 1 : vector<16x256xf32>, i32 -> vector<16x256xf32>
    %296 = arith.select %291, %294, %295 : vector<16x256xi1>, vector<16x256xf32>
    %c15_i32_130 = arith.constant 15 : i32
    %297 = tpu.dynamic_rotate %286 by %c15_i32_130 dim 1 : vector<16x256xf32>, i32 -> vector<16x256xf32>
    %c255_i32_131 = arith.constant 255 : i32
    %298 = tpu.dynamic_rotate %286 by %c255_i32_131 dim 1 : vector<16x256xf32>, i32 -> vector<16x256xf32>
    %299 = arith.select %293, %297, %298 : vector<16x256xi1>, vector<16x256xf32>
    %c16_i32_132 = arith.constant 16 : i32
    %300 = tpu.dynamic_rotate %296 by %c16_i32_132 dim 1 : vector<16x256xf32>, i32 -> vector<16x256xf32>
    %c0_133 = arith.constant 0 : index
    %c0_134 = arith.constant 0 : index
    %301 = vector.load %arg5[%c0_133, %c0_134] : memref<160x256xf32, #tpu.memory_space<vmem>>, vector<16x256xf32>
    tpu.vector_store %arg5[%c0_133, %c0_134], %300 {strides = array<i32>} : memref<160x256xf32, #tpu.memory_space<vmem>>, vector<16x256xf32>,
    %c16_i32_135 = arith.constant 16 : i32
    %302 = tpu.dynamic_rotate %286 by %c16_i32_135 dim 1 : vector<16x256xf32>, i32 -> vector<16x256xf32>
    %c16_136 = arith.constant 16 : index
    %c0_137 = arith.constant 0 : index
    %303 = vector.load %arg5[%c16_136, %c0_137] : memref<160x256xf32, #tpu.memory_space<vmem>>, vector<16x256xf32>
    tpu.vector_store %arg5[%c16_136, %c0_137], %302 {strides = array<i32>} : memref<160x256xf32, #tpu.memory_space<vmem>>, vector<16x256xf32>,
    %c16_i32_138 = arith.constant 16 : i32
    %304 = tpu.dynamic_rotate %299 by %c16_i32_138 dim 1 : vector<16x256xf32>, i32 -> vector<16x256xf32>
    %c32_139 = arith.constant 32 : index
    %c0_140 = arith.constant 0 : index
    %305 = vector.load %arg5[%c32_139, %c0_140] : memref<160x256xf32, #tpu.memory_space<vmem>>, vector<16x256xf32>
    tpu.vector_store %arg5[%c32_139, %c0_140], %304 {strides = array<i32>} : memref<160x256xf32, #tpu.memory_space<vmem>>, vector<16x256xf32>,
    %c48_141 = arith.constant 48 : index
    %c0_142 = arith.constant 0 : index
    %306 = vector.load %arg5[%c48_141, %c0_142] : memref<160x256xf32, #tpu.memory_space<vmem>>, vector<16x256xf32>
    tpu.vector_store %arg5[%c48_141, %c0_142], %296 {strides = array<i32>} : memref<160x256xf32, #tpu.memory_space<vmem>>, vector<16x256xf32>,
    %c64_143 = arith.constant 64 : index
    %c0_144 = arith.constant 0 : index
    %307 = vector.load %arg5[%c64_143, %c0_144] : memref<160x256xf32, #tpu.memory_space<vmem>>, vector<16x256xf32>
    tpu.vector_store %arg5[%c64_143, %c0_144], %286 {strides = array<i32>} : memref<160x256xf32, #tpu.memory_space<vmem>>, vector<16x256xf32>,
    %c80_145 = arith.constant 80 : index
    %c0_146 = arith.constant 0 : index
    %308 = vector.load %arg5[%c80_145, %c0_146] : memref<160x256xf32, #tpu.memory_space<vmem>>, vector<16x256xf32>
    tpu.vector_store %arg5[%c80_145, %c0_146], %299 {strides = array<i32>} : memref<160x256xf32, #tpu.memory_space<vmem>>, vector<16x256xf32>,
    %c240_i32_147 = arith.constant 240 : i32
    %309 = tpu.dynamic_rotate %296 by %c240_i32_147 dim 1 : vector<16x256xf32>, i32 -> vector<16x256xf32>
    %c96_148 = arith.constant 96 : index
    %c0_149 = arith.constant 0 : index
    %310 = vector.load %arg5[%c96_148, %c0_149] : memref<160x256xf32, #tpu.memory_space<vmem>>, vector<16x256xf32>
    tpu.vector_store %arg5[%c96_148, %c0_149], %309 {strides = array<i32>} : memref<160x256xf32, #tpu.memory_space<vmem>>, vector<16x256xf32>,
    %c240_i32_150 = arith.constant 240 : i32
    %311 = tpu.dynamic_rotate %286 by %c240_i32_150 dim 1 : vector<16x256xf32>, i32 -> vector<16x256xf32>
    %c112_151 = arith.constant 112 : index
    %c0_152 = arith.constant 0 : index
    %312 = vector.load %arg5[%c112_151, %c0_152] : memref<160x256xf32, #tpu.memory_space<vmem>>, vector<16x256xf32>
    tpu.vector_store %arg5[%c112_151, %c0_152], %311 {strides = array<i32>} : memref<160x256xf32, #tpu.memory_space<vmem>>, vector<16x256xf32>,
    %c240_i32_153 = arith.constant 240 : i32
    %313 = tpu.dynamic_rotate %299 by %c240_i32_153 dim 1 : vector<16x256xf32>, i32 -> vector<16x256xf32>
    %c128_154 = arith.constant 128 : index
    %c0_155 = arith.constant 0 : index
    %314 = vector.load %arg5[%c128_154, %c0_155] : memref<160x256xf32, #tpu.memory_space<vmem>>, vector<16x256xf32>
    tpu.vector_store %arg5[%c128_154, %c0_155], %313 {strides = array<i32>} : memref<160x256xf32, #tpu.memory_space<vmem>>, vector<16x256xf32>,
    %c144_156 = arith.constant 144 : index
    %c0_157 = arith.constant 0 : index
    %315 = vector.load %arg5[%c144_156, %c0_157] : memref<160x256xf32, #tpu.memory_space<vmem>>, vector<16x256xf32>
    tpu.vector_store %arg5[%c144_156, %c0_157], %235 {strides = array<i32>} : memref<160x256xf32, #tpu.memory_space<vmem>>, vector<16x256xf32>,
    %c0_158 = arith.constant 0 : index
    %c0_159 = arith.constant 0 : index
    %316 = vector.load %arg5[%c0_158, %c0_159] : memref<160x256xf32, #tpu.memory_space<vmem>>, vector<160x256xf32>
    %cst_160 = arith.constant dense<0.000000e+00> : vector<16x256xf32>
    %317 = tpu.matmul %0, %316, %cst_160 {dimension_numbers = #tpu.dot_dimension_numbers<[1], [0], [0], [1], [0, 0, 1, 1], [], []>} : vector<16x160xf32>, vector<160x256xf32>, vector<16x256xf32> -> vector<16x256xf32>
    %318 = vector.broadcast %5 : vector<16x1xf32> to vector<16x256xf32>
    %319 = arith.addf %317, %318 : vector<16x256xf32>
    %320 = vector.extract_strided_slice %319 {offsets = [0, 0], sizes = [8, 256], strides = [1, 1]} : vector<16x256xf32> to vector<8x256xf32>
    %321 = vector.broadcast %242 : vector<8x1xf32> to vector<8x256xf32>
    %322 = arith.addf %320, %321 : vector<8x256xf32>
    %cst_161 = arith.constant 5.000000e-01 : f32
    %323 = vector.broadcast %cst_161 : f32 to vector<8x256xf32>
    %324 = arith.mulf %323, %322 : vector<8x256xf32>
    %cst_162 = arith.constant 4.471500e-02 : f32
    %325 = vector.broadcast %cst_162 : f32 to vector<8x256xf32>
    %326 = arith.mulf %325, %322 : vector<8x256xf32>
    %327 = arith.mulf %326, %322 : vector<8x256xf32>
    %328 = arith.mulf %327, %322 : vector<8x256xf32>
    %329 = arith.addf %322, %328 : vector<8x256xf32>
    %cst_163 = arith.constant 0.797884583 : f32
    %330 = vector.broadcast %cst_163 : f32 to vector<8x256xf32>
    %331 = arith.mulf %330, %329 : vector<8x256xf32>
    %332 = math.tanh %331 : vector<8x256xf32>
    %cst_164 = arith.constant 1.000000e+00 : f32
    %333 = vector.broadcast %cst_164 : f32 to vector<8x256xf32>
    %334 = arith.addf %333, %332 : vector<8x256xf32>
    %335 = arith.mulf %324, %334 : vector<8x256xf32>
    %336 = vector.broadcast %243 : vector<8x1xf32> to vector<8x256xf32>
    %337 = arith.addf %335, %336 : vector<8x256xf32>
    %cst_165 = arith.constant 5.000000e-01 : f32
    %338 = vector.broadcast %cst_165 : f32 to vector<8x256xf32>
    %339 = arith.mulf %338, %337 : vector<8x256xf32>
    %cst_166 = arith.constant 4.471500e-02 : f32
    %340 = vector.broadcast %cst_166 : f32 to vector<8x256xf32>
    %341 = arith.mulf %340, %337 : vector<8x256xf32>
    %342 = arith.mulf %341, %337 : vector<8x256xf32>
    %343 = arith.mulf %342, %337 : vector<8x256xf32>
    %344 = arith.addf %337, %343 : vector<8x256xf32>
    %cst_167 = arith.constant 0.797884583 : f32
    %345 = vector.broadcast %cst_167 : f32 to vector<8x256xf32>
    %346 = arith.mulf %345, %344 : vector<8x256xf32>
    %347 = math.tanh %346 : vector<8x256xf32>
    %cst_168 = arith.constant 1.000000e+00 : f32
    %348 = vector.broadcast %cst_168 : f32 to vector<8x256xf32>
    %349 = arith.addf %348, %347 : vector<8x256xf32>
    %350 = arith.mulf %339, %349 : vector<8x256xf32>
    %351 = vector.extract_strided_slice %319 {offsets = [8, 0], sizes = [8, 256], strides = [1, 1]} : vector<16x256xf32> to vector<8x256xf32>
    %352 = vector.shape_cast %350 : vector<8x256xf32> to vector<1x8x256xf32>
    %cst_169 = arith.constant dense<0.000000e+00> : vector<1xf32>
    %353 = vector.multi_reduction <add>, %352, %cst_169 [1, 2] : vector<1x8x256xf32> to vector<1xf32>
    %354 = vector.shape_cast %353 : vector<1xf32> to vector<1x1x1xf32>
    %355 = vector.extract %354[0, 0, 0] : f32 from vector<1x1x1xf32>
    %356 = vector.broadcast %355 : f32 to vector<1x1xf32>
    %357 = arith.mulf %350, %350 : vector<8x256xf32>
    %358 = vector.shape_cast %357 : vector<8x256xf32> to vector<1x8x256xf32>
    %cst_170 = arith.constant dense<0.000000e+00> : vector<1xf32>
    %359 = vector.multi_reduction <add>, %358, %cst_170 [1, 2] : vector<1x8x256xf32> to vector<1xf32>
    %360 = vector.shape_cast %359 : vector<1xf32> to vector<1x1x1xf32>
    %361 = vector.extract %360[0, 0, 0] : f32 from vector<1x1x1xf32>
    %362 = vector.broadcast %361 : f32 to vector<1x1xf32>
    %cst_171 = arith.constant 2.048000e+03 : f32
    %363 = vector.broadcast %cst_171 : f32 to vector<1x1xf32>
    %364 = arith.divf %356, %363 : vector<1x1xf32>
    %cst_172 = arith.constant 2.048000e+03 : f32
    %365 = vector.broadcast %cst_172 : f32 to vector<1x1xf32>
    %366 = arith.divf %362, %365 : vector<1x1xf32>
    %367 = arith.mulf %364, %364 : vector<1x1xf32>
    %368 = arith.subf %366, %367 : vector<1x1xf32>
    %cst_173 = arith.constant 9.99999974E-6 : f32
    %369 = vector.broadcast %cst_173 : f32 to vector<1x1xf32>
    %370 = arith.addf %368, %369 : vector<1x1xf32>
    %371 = math.rsqrt %370 : vector<1x1xf32>
    %372 = vector.broadcast %364 : vector<1x1xf32> to vector<8x256xf32>
    %373 = arith.subf %350, %372 : vector<8x256xf32>
    %374 = vector.broadcast %371 : vector<1x1xf32> to vector<8x1xf32>
    %375 = arith.mulf %374, %6 : vector<8x1xf32>
    %376 = vector.broadcast %375 : vector<8x1xf32> to vector<8x256xf32>
    %377 = arith.mulf %373, %376 : vector<8x256xf32>
    %378 = vector.broadcast %7 : vector<8x1xf32> to vector<8x256xf32>
    %379 = arith.addf %377, %378 : vector<8x256xf32>
    %cst_174 = arith.constant 5.000000e-01 : f32
    %380 = vector.broadcast %cst_174 : f32 to vector<8x256xf32>
    %381 = arith.mulf %380, %379 : vector<8x256xf32>
    %cst_175 = arith.constant 4.471500e-02 : f32
    %382 = vector.broadcast %cst_175 : f32 to vector<8x256xf32>
    %383 = arith.mulf %382, %379 : vector<8x256xf32>
    %384 = arith.mulf %383, %379 : vector<8x256xf32>
    %385 = arith.mulf %384, %379 : vector<8x256xf32>
    %386 = arith.addf %379, %385 : vector<8x256xf32>
    %cst_176 = arith.constant 0.797884583 : f32
    %387 = vector.broadcast %cst_176 : f32 to vector<8x256xf32>
    %388 = arith.mulf %387, %386 : vector<8x256xf32>
    %389 = math.tanh %388 : vector<8x256xf32>
    %cst_177 = arith.constant 1.000000e+00 : f32
    %390 = vector.broadcast %cst_177 : f32 to vector<8x256xf32>
    %391 = arith.addf %390, %389 : vector<8x256xf32>
    %392 = arith.mulf %381, %391 : vector<8x256xf32>
    %393 = tpu.iota {dimensions = array<i32: 1>} : vector<8x256xi32>
    %c15_i32_178 = arith.constant 15 : i32
    %394 = vector.broadcast %c15_i32_178 : i32 to vector<8x256xi32>
    %395 = arith.andi %393, %394 : vector<8x256xi32>
    %c0_i32_179 = arith.constant 0 : i32
    %396 = vector.broadcast %c0_i32_179 : i32 to vector<8x256xi32>
    %397 = arith.cmpi eq, %395, %396 : vector<8x256xi32>
    %c15_i32_180 = arith.constant 15 : i32
    %398 = vector.broadcast %c15_i32_180 : i32 to vector<8x256xi32>
    %399 = arith.cmpi eq, %395, %398 : vector<8x256xi32>
    %c241_i32_181 = arith.constant 241 : i32
    %400 = tpu.dynamic_rotate %392 by %c241_i32_181 dim 1 : vector<8x256xf32>, i32 -> vector<8x256xf32>
    %c1_i32_182 = arith.constant 1 : i32
    %401 = tpu.dynamic_rotate %392 by %c1_i32_182 dim 1 : vector<8x256xf32>, i32 -> vector<8x256xf32>
    %402 = arith.select %397, %400, %401 : vector<8x256xi1>, vector<8x256xf32>
    %c15_i32_183 = arith.constant 15 : i32
    %403 = tpu.dynamic_rotate %392 by %c15_i32_183 dim 1 : vector<8x256xf32>, i32 -> vector<8x256xf32>
    %c255_i32_184 = arith.constant 255 : i32
    %404 = tpu.dynamic_rotate %392 by %c255_i32_184 dim 1 : vector<8x256xf32>, i32 -> vector<8x256xf32>
    %405 = arith.select %399, %403, %404 : vector<8x256xi1>, vector<8x256xf32>
    %c16_i32_185 = arith.constant 16 : i32
    %406 = tpu.dynamic_rotate %402 by %c16_i32_185 dim 1 : vector<8x256xf32>, i32 -> vector<8x256xf32>
    %c0_186 = arith.constant 0 : index
    %c0_187 = arith.constant 0 : index
    %407 = vector.load %arg5[%c0_186, %c0_187] : memref<160x256xf32, #tpu.memory_space<vmem>>, vector<8x256xf32>
    tpu.vector_store %arg5[%c0_186, %c0_187], %406 {strides = array<i32>} : memref<160x256xf32, #tpu.memory_space<vmem>>, vector<8x256xf32>,
    %c16_i32_188 = arith.constant 16 : i32
    %408 = tpu.dynamic_rotate %392 by %c16_i32_188 dim 1 : vector<8x256xf32>, i32 -> vector<8x256xf32>
    %c8_189 = arith.constant 8 : index
    %c0_190 = arith.constant 0 : index
    %409 = vector.load %arg5[%c8_189, %c0_190] : memref<160x256xf32, #tpu.memory_space<vmem>>, vector<8x256xf32>
    tpu.vector_store %arg5[%c8_189, %c0_190], %408 {strides = array<i32>} : memref<160x256xf32, #tpu.memory_space<vmem>>, vector<8x256xf32>,
    %c16_i32_191 = arith.constant 16 : i32
    %410 = tpu.dynamic_rotate %405 by %c16_i32_191 dim 1 : vector<8x256xf32>, i32 -> vector<8x256xf32>
    %c16_192 = arith.constant 16 : index
    %c0_193 = arith.constant 0 : index
    %411 = vector.load %arg5[%c16_192, %c0_193] : memref<160x256xf32, #tpu.memory_space<vmem>>, vector<8x256xf32>
    tpu.vector_store %arg5[%c16_192, %c0_193], %410 {strides = array<i32>} : memref<160x256xf32, #tpu.memory_space<vmem>>, vector<8x256xf32>,
    %c24_194 = arith.constant 24 : index
    %c0_195 = arith.constant 0 : index
    %412 = vector.load %arg5[%c24_194, %c0_195] : memref<160x256xf32, #tpu.memory_space<vmem>>, vector<8x256xf32>
    tpu.vector_store %arg5[%c24_194, %c0_195], %402 {strides = array<i32>} : memref<160x256xf32, #tpu.memory_space<vmem>>, vector<8x256xf32>,
    %c32_196 = arith.constant 32 : index
    %c0_197 = arith.constant 0 : index
    %413 = vector.load %arg5[%c32_196, %c0_197] : memref<160x256xf32, #tpu.memory_space<vmem>>, vector<8x256xf32>
    tpu.vector_store %arg5[%c32_196, %c0_197], %392 {strides = array<i32>} : memref<160x256xf32, #tpu.memory_space<vmem>>, vector<8x256xf32>,
    %c40_198 = arith.constant 40 : index
    %c0_199 = arith.constant 0 : index
    %414 = vector.load %arg5[%c40_198, %c0_199] : memref<160x256xf32, #tpu.memory_space<vmem>>, vector<8x256xf32>
    tpu.vector_store %arg5[%c40_198, %c0_199], %405 {strides = array<i32>} : memref<160x256xf32, #tpu.memory_space<vmem>>, vector<8x256xf32>,
    %c240_i32_200 = arith.constant 240 : i32
    %415 = tpu.dynamic_rotate %402 by %c240_i32_200 dim 1 : vector<8x256xf32>, i32 -> vector<8x256xf32>
    %c48_201 = arith.constant 48 : index
    %c0_202 = arith.constant 0 : index
    %416 = vector.load %arg5[%c48_201, %c0_202] : memref<160x256xf32, #tpu.memory_space<vmem>>, vector<8x256xf32>
    tpu.vector_store %arg5[%c48_201, %c0_202], %415 {strides = array<i32>} : memref<160x256xf32, #tpu.memory_space<vmem>>, vector<8x256xf32>,
    %c240_i32_203 = arith.constant 240 : i32
    %417 = tpu.dynamic_rotate %392 by %c240_i32_203 dim 1 : vector<8x256xf32>, i32 -> vector<8x256xf32>
    %c56_204 = arith.constant 56 : index
    %c0_205 = arith.constant 0 : index
    %418 = vector.load %arg5[%c56_204, %c0_205] : memref<160x256xf32, #tpu.memory_space<vmem>>, vector<8x256xf32>
    tpu.vector_store %arg5[%c56_204, %c0_205], %417 {strides = array<i32>} : memref<160x256xf32, #tpu.memory_space<vmem>>, vector<8x256xf32>,
    %c240_i32_206 = arith.constant 240 : i32
    %419 = tpu.dynamic_rotate %405 by %c240_i32_206 dim 1 : vector<8x256xf32>, i32 -> vector<8x256xf32>
    %c64_207 = arith.constant 64 : index
    %c0_208 = arith.constant 0 : index
    %420 = vector.load %arg5[%c64_207, %c0_208] : memref<160x256xf32, #tpu.memory_space<vmem>>, vector<8x256xf32>
    tpu.vector_store %arg5[%c64_207, %c0_208], %419 {strides = array<i32>} : memref<160x256xf32, #tpu.memory_space<vmem>>, vector<8x256xf32>,
    %c0_209 = arith.constant 0 : index
    %c0_210 = arith.constant 0 : index
    %421 = vector.load %arg5[%c0_209, %c0_210] : memref<160x256xf32, #tpu.memory_space<vmem>>, vector<160x256xf32>
    %cst_211 = arith.constant dense<0.000000e+00> : vector<8x256xf32>
    %422 = tpu.matmul %1, %421, %cst_211 {dimension_numbers = #tpu.dot_dimension_numbers<[1], [0], [0], [1], [0, 0, 1, 1], [], []>} : vector<8x160xf32>, vector<160x256xf32>, vector<8x256xf32> -> vector<8x256xf32>
    %423 = vector.broadcast %8 : vector<8x1xf32> to vector<8x256xf32>
    %424 = arith.addf %422, %423 : vector<8x256xf32>
    %425 = vector.broadcast %244 : vector<8x1xf32> to vector<8x256xf32>
    %426 = arith.addf %424, %425 : vector<8x256xf32>
    %cst_212 = arith.constant 5.000000e-01 : f32
    %427 = vector.broadcast %cst_212 : f32 to vector<8x256xf32>
    %428 = arith.mulf %427, %426 : vector<8x256xf32>
    %cst_213 = arith.constant 4.471500e-02 : f32
    %429 = vector.broadcast %cst_213 : f32 to vector<8x256xf32>
    %430 = arith.mulf %429, %426 : vector<8x256xf32>
    %431 = arith.mulf %430, %426 : vector<8x256xf32>
    %432 = arith.mulf %431, %426 : vector<8x256xf32>
    %433 = arith.addf %426, %432 : vector<8x256xf32>
    %cst_214 = arith.constant 0.797884583 : f32
    %434 = vector.broadcast %cst_214 : f32 to vector<8x256xf32>
    %435 = arith.mulf %434, %433 : vector<8x256xf32>
    %436 = math.tanh %435 : vector<8x256xf32>
    %cst_215 = arith.constant 1.000000e+00 : f32
    %437 = vector.broadcast %cst_215 : f32 to vector<8x256xf32>
    %438 = arith.addf %437, %436 : vector<8x256xf32>
    %439 = arith.mulf %428, %438 : vector<8x256xf32>
    %440 = vector.broadcast %245 : vector<8x1xf32> to vector<8x256xf32>
    %441 = arith.addf %439, %440 : vector<8x256xf32>
    %cst_216 = arith.constant 5.000000e-01 : f32
    %442 = vector.broadcast %cst_216 : f32 to vector<8x256xf32>
    %443 = arith.mulf %442, %441 : vector<8x256xf32>
    %cst_217 = arith.constant 4.471500e-02 : f32
    %444 = vector.broadcast %cst_217 : f32 to vector<8x256xf32>
    %445 = arith.mulf %444, %441 : vector<8x256xf32>
    %446 = arith.mulf %445, %441 : vector<8x256xf32>
    %447 = arith.mulf %446, %441 : vector<8x256xf32>
    %448 = arith.addf %441, %447 : vector<8x256xf32>
    %cst_218 = arith.constant 0.797884583 : f32
    %449 = vector.broadcast %cst_218 : f32 to vector<8x256xf32>
    %450 = arith.mulf %449, %448 : vector<8x256xf32>
    %451 = math.tanh %450 : vector<8x256xf32>
    %cst_219 = arith.constant 1.000000e+00 : f32
    %452 = vector.broadcast %cst_219 : f32 to vector<8x256xf32>
    %453 = arith.addf %452, %451 : vector<8x256xf32>
    %454 = arith.mulf %443, %453 : vector<8x256xf32>
    %455 = arith.addf %454, %351 : vector<8x256xf32>
    %c1_220 = arith.constant 1 : index
    %c0_221 = arith.constant 0 : index
    %c0_222 = arith.constant 0 : index
    %456 = vector.load %arg4[%c1_220, %c0_221, %c0_222] : memref<2x8x256xf32, #tpu.memory_space<vmem>>, vector<1x8x256xf32>
    %457 = vector.shape_cast %456 : vector<1x8x256xf32> to vector<8x256xf32>
    %458 = vector.shape_cast %455 : vector<8x256xf32> to vector<1x8x256xf32>
    tpu.vector_store %arg4[%c1_220, %c0_221, %c0_222], %458 {strides = array<i32>} : memref<2x8x256xf32, #tpu.memory_space<vmem>>, vector<1x8x256xf32>,
    return
  }
}

</mosaic_0001>

<llo_original>
// kernel: upblock_forward.1
$region0: #{upblock_forward.1}
  #allocation0 [shape = 'u32[]', space=smem, size = 0x4, offset = 0x4, fixed_abs, tag = 'smem constant byte address 0x4 - core index']
  #allocation1 [shape = 'u32[72,128]{1,0:T(1,128)}', space=vmem, size = 0x9000, scoped, tag = 'internal scratch']
  #allocation2 [shape = 'f32[160,256]{1,0:T(8,128)}', space=vmem, size = 0x28000, scoped, tag = 'scratch operand']
  %s0 = inlined_call_operand.vmem [shape: f32[2,16,256], index: 0, kind: input, shape index: {}]
  %s1 = inlined_call_operand.vmem [shape: f32[2,1,160], index: 1, kind: input, shape index: {}]
  %s2 = inlined_call_operand.vmem [shape: f32[56,160], index: 2, kind: input, shape index: {}]
  %s3 = inlined_call_operand.vmem [shape: f32[72,1], index: 3, kind: input, shape index: {}]
  %s4 = inlined_call_operand.vmem [shape: f32[2,8,256], index: 4, kind: output, shape index: {}]
  %s5 = sld [smem:[#allocation0]]
  $region26: #{upblock_forward.1} parent=0
    _
  %s7 = ssub.s32 1, %s5
  %s8 = scalar_select 0, %s7, %s5
  // Predicated region
  $region2: #{upblock_forward.1} parent=0 // pred_check
    _
  $region3: #{upblock_forward.1} parent=0 // pred_check_branch
    %10 = sbr.rel (0) target = $region5
  $region4: #{upblock_forward.1} parent=0 // pred_region
    _
  $region5: #{upblock_forward.1} parent=0 // pred_fallthru
    _
  // Predicated region
  $region6: #{upblock_forward.1} parent=0 // pred_check
    _
  $region7: #{upblock_forward.1} parent=0 // pred_check_branch
    %12 = sbr.rel (0) target = $region9
  $region8: #{upblock_forward.1} parent=0 // pred_region
    _
  $region9: #{upblock_forward.1} parent=0 // pred_fallthru
    _
  // Predicated region
  $region10: #{upblock_forward.1} parent=0 // pred_check
    _
  $region11: #{upblock_forward.1} parent=0 // pred_check_branch
    %14 = sbr.rel (0) target = $region13
  $region12: #{upblock_forward.1} parent=0 // pred_region
    _
  $region13: #{upblock_forward.1} parent=0 // pred_fallthru
    _
  // Predicated region
  $region14: #{upblock_forward.1} parent=0 // pred_check
    _
  $region15: #{upblock_forward.1} parent=0 // pred_check_branch
    %16 = sbr.rel (0) target = $region17
  $region16: #{upblock_forward.1} parent=0 // pred_region
    _
  $region17: #{upblock_forward.1} parent=0 // pred_fallthru
    _
  %v17 = vld [vmem:[%s2] sm:$0xff]
  %v18 = vld [vmem:[%s2 + $0x8] sm:$0xff]
  %v19 = vld [vmem:[%s2 + $0x10] sm:$0xff]
  %v20 = vld [vmem:[%s2 + $0x18] sm:$0xff]
  %v21 = vld [vmem:[%s2 + $0x20] sm:$0xff]
  %v22 = vld [vmem:[%s2 + $0x28] sm:$0xff]
  %v23 = vld [vmem:[%s2 + $0x30] sm:$0xff]
  %v24 = vld [vmem:[%s2 + $0x38] sm:$0xff]
  %v25 = vld [vmem:[%s2 + $0x40] sm:$0xff]
  %v26 = vld [vmem:[%s2 + $0x48] sm:$0xff]
  %v27 = vld [vmem:[%s2 + $0x50] sm:$0xff]
  %v28 = vld [vmem:[%s2 + $0x58] sm:$0xff]
  %v29 = vld [vmem:[%s2 + $0x60] sm:$0xff]
  %v30 = vld [vmem:[%s2 + $0x68] sm:$0xff]
  %v31 = vld [vmem:[%s3] sm:$0xff]
  %v32 = vld [vmem:[%s3 + $0x8] sm:$0xff]
  %v33 = vld [vmem:[%s3 + $0x10] sm:$0xff]
  %v34 = vld [vmem:[%s3 + $0x18] sm:$0xff]
  %v35 = vld [vmem:[%s3 + $0x20] sm:$0xff]
  %v36 = vld [vmem:[%s3 + $0x28] sm:$0xff]
  %v37 = vld [vmem:[%s3 + $0x30] sm:$0xff]
  %v38 = vld [vmem:[%s3 + $0x38] sm:$0xff]
  %v39 = vld [vmem:[%s3 + $0x40] sm:$0xff]
  %v40 = vld [vmem:[%s0] sm:$0xff]
  %v41 = vld [vmem:[%s0 + $0x8] sm:$0xff]
  %v42 = vld [vmem:[%s0 + $0x10] sm:$0xff]
  %v43 = vld [vmem:[%s0 + $0x18] sm:$0xff]
  %v44 = vld [vmem:[%s1] sm:$0x3]
  %v46 = vperm.slane %v44, 0
  %v47 = vperm.slane %v44, 1
  %v50 = vmul.f32 %v23, %v46
  %v51 = vmul.f32 %v24, %v47
  %v52 = vmul.f32 %v25, %v46
  %v53 = vmul.f32 %v26, %v47
  %v54 = vmul.f32 %v27, %v46
  %v55 = vmul.f32 %v28, %v47
  %v56 = vmul.f32 %v29, %v46
  %v57 = vmul.f32 %v30, %v47
  %vm58 = vcmask 261120
  %v59 = vsel %vm58, %v51, 0.0
  %v60 = vadd.f32 %v50, %v59
  %61 = vadd.xlane.f32.xlu0 %v60
  %v62 = vpop.xlane.xlu0 %61
  %v63 = vsel %vm58, %v53, 0.0
  %v64 = vadd.f32 %v52, %v63
  %65 = vadd.xlane.f32.xlu0 %v64
  %v66 = vpop.xlane.xlu0 %65
  %v67 = vsel %vm58, %v55, 0.0
  %v68 = vadd.f32 %v54, %v67
  %69 = vadd.xlane.f32.xlu0 %v68
  %v70 = vpop.xlane.xlu0 %69
  %v71 = vsel %vm58, %v57, 0.0
  %v72 = vadd.f32 %v56, %v71
  %73 = vadd.xlane.f32.xlu0 %v72
  %v74 = vpop.xlane.xlu0 %73
  %v75 = vadd.f32 %v40, %v41
  %v76 = vadd.f32 %v75, %v42
  %v77 = vadd.f32 %v76, %v43
  %78 = vadd.xlane.f32.xlu0 %v77
  %v79 = vpop.xlane.xlu0 %78
  %v80 = vrot.slane %v79, 4
  %v81 = vadd.f32 %v79, %v80
  %v82 = vrot.slane %v81, 2
  %v83 = vadd.f32 %v81, %v82
  %v84 = vrot.slane %v83, 1
  %v85 = vadd.f32 %v83, %v84
  %s86 = vtos %v85
  %v87 = vstv %s86
  %v88 = vmul.f32 %v40, %v40
  %v89 = vmul.f32 %v41, %v41
  %v90 = vmul.f32 %v42, %v42
  %v91 = vmul.f32 %v43, %v43
  %v92 = vadd.f32 %v88, %v89
  %v93 = vadd.f32 %v92, %v90
  %v94 = vadd.f32 %v93, %v91
  %95 = vadd.xlane.f32.xlu0 %v94
  %v96 = vpop.xlane.xlu0 %95
  %v97 = vrot.slane %v96, 4
  %v98 = vadd.f32 %v96, %v97
  %v99 = vrot.slane %v98, 2
  %v100 = vadd.f32 %v98, %v99
  %v101 = vrot.slane %v100, 1
  %v102 = vadd.f32 %v100, %v101
  %s103 = vtos %v102
  %v104 = vstv %s103
  %v105 = vrcp.pop 4096.0
  %v106 = vmul.f32 4096.0, %v105
  %v107 = vsub.f32 1.0, %v106
  %v108 = vmul.f32 %v105, %v107
  %v109 = vadd.f32 %v105, %v108
  %vm110 = vweird.f32 %v105
  %v111 = vsel %vm110, %v105, %v109
  %v112 = vmul.f32 %v87, %v111
  %v113 = vmul.f32 %v104, %v111
  %v114 = vmul.f32 %v112, %v112
  %v115 = vsub.f32 %v113, %v114
  %v116 = vadd.f32 %v115, 1e-05
  %v117 = vrsqrt.pop %v116
  %v118 = vmul.f32 %v117, %v116
  %v119 = vmul.f32 %v118, %v117
  %v120 = vmul.f32 0.5, %v119
  %v121 = vsub.f32 1.5, %v120
  %v122 = vmul.f32 %v117, %v121
  %vm123 = vweird.f32 %v116
  %vm124 = vweird.f32 %v117
  %vm125 = vmor %vm123, %vm124
  %v126 = vsel %vm125, %v117, %v122
  %v127 = vsub.f32 %v40, %v112
  %v128 = vsub.f32 %v41, %v112
  %v129 = vsub.f32 %v42, %v112
  %v130 = vsub.f32 %v43, %v112
  %v131 = vmul.f32 %v126, %v31
  %v132 = vmul.f32 %v126, %v32
  %134 = vset.pattern.permute.xlu0 0
  %135 = vperm.xlu0 %134, %v131
  %v136 = vpop.permute.xlu0 %135
  %139 = vset.pattern.permute.xlu0 0
  %140 = vperm.xlu0 %139, %v132
  %v141 = vpop.permute.xlu0 %140
  %v143 = vmul.f32 %v127, %v136
  %v144 = vmul.f32 %v128, %v136
  %v145 = vmul.f32 %v129, %v141
  %v146 = vmul.f32 %v130, %v141
  %148 = vset.pattern.permute.xlu0 0
  %149 = vperm.xlu0 %148, %v33
  %v150 = vpop.permute.xlu0 %149
  %153 = vset.pattern.permute.xlu0 0
  %154 = vperm.xlu0 %153, %v34
  %v155 = vpop.permute.xlu0 %154
  %v157 = vadd.f32 %v143, %v150
  %v158 = vadd.f32 %v144, %v150
  %v159 = vadd.f32 %v145, %v155
  %v160 = vadd.f32 %v146, %v155
  %v161 = vmul.f32 %v157, 0.5
  %v162 = vmul.f32 %v158, 0.5
  %v163 = vmul.f32 %v159, 0.5
  %v164 = vmul.f32 %v160, 0.5
  %v165 = vmul.f32 %v157, 0.044715
  %v166 = vmul.f32 %v158, 0.044715
  %v167 = vmul.f32 %v159, 0.044715
  %v168 = vmul.f32 %v160, 0.044715
  %v169 = vmul.f32 %v165, %v157
  %v170 = vmul.f32 %v166, %v158
  %v171 = vmul.f32 %v167, %v159
  %v172 = vmul.f32 %v168, %v160
  %v173 = vmul.f32 %v169, %v157
  %v174 = vmul.f32 %v170, %v158
  %v175 = vmul.f32 %v171, %v159
  %v176 = vmul.f32 %v172, %v160
  %v177 = vadd.f32 %v157, %v173
  %v178 = vadd.f32 %v158, %v174
  %v179 = vadd.f32 %v159, %v175
  %v180 = vadd.f32 %v160, %v176
  %v181 = vmul.f32 %v177, 0.7978846
  %v182 = vmul.f32 %v178, 0.7978846
  %v183 = vmul.f32 %v179, 0.7978846
  %v184 = vmul.f32 %v180, 0.7978846
  %v185 = vtanh.pop %v181
  %v186 = vtanh.pop %v182
  %v187 = vtanh.pop %v183
  %v188 = vtanh.pop %v184
  %v189 = vadd.f32 %v185, 1.0
  %v190 = vadd.f32 %v186, 1.0
  %v191 = vadd.f32 %v187, 1.0
  %v192 = vadd.f32 %v188, 1.0
  %v193 = vmul.f32 %v161, %v189
  %v194 = vmul.f32 %v162, %v190
  %v195 = vmul.f32 %v163, %v191
  %v196 = vmul.f32 %v164, %v192
  %v197 = vlaneseq
  %v198 = vand.u32 %v197, 127
  %v199 = vadd.s32 %v198, 128
  %v200 = vand.u32 %v198, 15
  %v201 = vand.u32 %v199, 15
  %vm202 = vcmp.eq.s32.totalorder %v200, 0
  %vm203 = vcmp.eq.s32.totalorder %v201, 0
  %vm204 = vcmp.eq.s32.totalorder %v200, 15
  %vm205 = vcmp.eq.s32.totalorder %v201, 15
  %206 = vrot.lane.b32.xlu0 %v193, 113
  %v207 = vpop.permute.xlu0 %206
  %208 = vrot.lane.b32.xlu0 %v195, 113
  %v209 = vpop.permute.xlu0 %208
  %210 = vrot.lane.b32.xlu0 %v194, 113
  %v211 = vpop.permute.xlu0 %210
  %212 = vrot.lane.b32.xlu0 %v196, 113
  %v213 = vpop.permute.xlu0 %212
  %vm214 = vcmp.lt.s32.totalorder %v198, 113
  %v215 = vsel %vm214, %v207, %v211
  %v216 = vsel %vm214, %v209, %v213
  %v217 = vsel %vm214, %v211, %v207
  %v218 = vsel %vm214, %v213, %v209
  %219 = vrot.lane.b32.xlu0 %v193, 1
  %v220 = vpop.permute.xlu0 %219
  %221 = vrot.lane.b32.xlu0 %v195, 1
  %v222 = vpop.permute.xlu0 %221
  %223 = vrot.lane.b32.xlu0 %v194, 1
  %v224 = vpop.permute.xlu0 %223
  %225 = vrot.lane.b32.xlu0 %v196, 1
  %v226 = vpop.permute.xlu0 %225
  %vm227 = vcmp.lt.s32.totalorder %v198, 1
  %v228 = vsel %vm227, %v220, %v224
  %v229 = vsel %vm227, %v222, %v226
  %v230 = vsel %vm227, %v224, %v220
  %v231 = vsel %vm227, %v226, %v222
  %v232 = vsel %vm202, %v215, %v230
  %v233 = vsel %vm203, %v217, %v228
  %v234 = vsel %vm202, %v216, %v231
  %v235 = vsel %vm203, %v218, %v229
  %236 = vrot.lane.b32.xlu0 %v193, 15
  %v237 = vpop.permute.xlu0 %236
  %238 = vrot.lane.b32.xlu0 %v195, 15
  %v239 = vpop.permute.xlu0 %238
  %240 = vrot.lane.b32.xlu0 %v194, 15
  %v241 = vpop.permute.xlu0 %240
  %242 = vrot.lane.b32.xlu0 %v196, 15
  %v243 = vpop.permute.xlu0 %242
  %vm244 = vcmp.lt.s32.totalorder %v198, 15
  %v245 = vsel %vm244, %v237, %v241
  %v246 = vsel %vm244, %v239, %v243
  %v247 = vsel %vm244, %v241, %v237
  %v248 = vsel %vm244, %v243, %v239
  %249 = vrot.lane.b32.xlu0 %v193, 127
  %v250 = vpop.permute.xlu0 %249
  %251 = vrot.lane.b32.xlu0 %v195, 127
  %v252 = vpop.permute.xlu0 %251
  %253 = vrot.lane.b32.xlu0 %v194, 127
  %v254 = vpop.permute.xlu0 %253
  %255 = vrot.lane.b32.xlu0 %v196, 127
  %v256 = vpop.permute.xlu0 %255
  %vm257 = vcmp.lt.s32.totalorder %v198, 127
  %v258 = vsel %vm257, %v250, %v254
  %v259 = vsel %vm257, %v252, %v256
  %v260 = vsel %vm257, %v254, %v250
  %v261 = vsel %vm257, %v256, %v252
  %v262 = vsel %vm204, %v247, %v258
  %v263 = vsel %vm205, %v245, %v260
  %v264 = vsel %vm204, %v248, %v259
  %v265 = vsel %vm205, %v246, %v261
  %266 = vrot.lane.b32.xlu0 %v232, 16
  %v267 = vpop.permute.xlu0 %266
  %268 = vrot.lane.b32.xlu0 %v234, 16
  %v269 = vpop.permute.xlu0 %268
  %270 = vrot.lane.b32.xlu0 %v233, 16
  %v271 = vpop.permute.xlu0 %270
  %272 = vrot.lane.b32.xlu0 %v235, 16
  %v273 = vpop.permute.xlu0 %272
  %vm274 = vcmp.lt.s32.totalorder %v198, 16
  %v275 = vsel %vm274, %v267, %v271
  %v276 = vsel %vm274, %v269, %v273
  %v277 = vsel %vm274, %v271, %v267
  %v278 = vsel %vm274, %v273, %v269
  %279 = vst [vmem:[#allocation2] sm:$0xff] %v277
  %280 = vst [vmem:[#allocation2 + $0x8] sm:$0xff] %v275
  %281 = vst [vmem:[#allocation2 + $0x10] sm:$0xff] %v278
  %282 = vst [vmem:[#allocation2 + $0x18] sm:$0xff] %v276
  %283 = vrot.lane.b32.xlu0 %v193, 16
  %v284 = vpop.permute.xlu0 %283
  %285 = vrot.lane.b32.xlu0 %v195, 16
  %v286 = vpop.permute.xlu0 %285
  %287 = vrot.lane.b32.xlu0 %v194, 16
  %v288 = vpop.permute.xlu0 %287
  %289 = vrot.lane.b32.xlu0 %v196, 16
  %v290 = vpop.permute.xlu0 %289
  %v291 = vsel %vm274, %v284, %v288
  %v292 = vsel %vm274, %v286, %v290
  %v293 = vsel %vm274, %v288, %v284
  %v294 = vsel %vm274, %v290, %v286
  %295 = vst [vmem:[#allocation2 + $0x20] sm:$0xff] %v293
  %296 = vst [vmem:[#allocation2 + $0x28] sm:$0xff] %v291
  %297 = vst [vmem:[#allocation2 + $0x30] sm:$0xff] %v294
  %298 = vst [vmem:[#allocation2 + $0x38] sm:$0xff] %v292
  %299 = vrot.lane.b32.xlu0 %v262, 16
  %v300 = vpop.permute.xlu0 %299
  %301 = vrot.lane.b32.xlu0 %v264, 16
  %v302 = vpop.permute.xlu0 %301
  %303 = vrot.lane.b32.xlu0 %v263, 16
  %v304 = vpop.permute.xlu0 %303
  %305 = vrot.lane.b32.xlu0 %v265, 16
  %v306 = vpop.permute.xlu0 %305
  %v307 = vsel %vm274, %v300, %v304
  %v308 = vsel %vm274, %v302, %v306
  %v309 = vsel %vm274, %v304, %v300
  %v310 = vsel %vm274, %v306, %v302
  %311 = vst [vmem:[#allocation2 + $0x40] sm:$0xff] %v309
  %312 = vst [vmem:[#allocation2 + $0x48] sm:$0xff] %v307
  %313 = vst [vmem:[#allocation2 + $0x50] sm:$0xff] %v310
  %314 = vst [vmem:[#allocation2 + $0x58] sm:$0xff] %v308
  %315 = vst [vmem:[#allocation2 + $0x60] sm:$0xff] %v232
  %316 = vst [vmem:[#allocation2 + $0x68] sm:$0xff] %v233
  %317 = vst [vmem:[#allocation2 + $0x70] sm:$0xff] %v234
  %318 = vst [vmem:[#allocation2 + $0x78] sm:$0xff] %v235
  %319 = vst [vmem:[#allocation2 + $0x80] sm:$0xff] %v193
  %320 = vst [vmem:[#allocation2 + $0x88] sm:$0xff] %v194
  %321 = vst [vmem:[#allocation2 + $0x90] sm:$0xff] %v195
  %322 = vst [vmem:[#allocation2 + $0x98] sm:$0xff] %v196
  %323 = vst [vmem:[#allocation2 + $0xa0] sm:$0xff] %v262
  %324 = vst [vmem:[#allocation2 + $0xa8] sm:$0xff] %v263
  %325 = vst [vmem:[#allocation2 + $0xb0] sm:$0xff] %v264
  %326 = vst [vmem:[#allocation2 + $0xb8] sm:$0xff] %v265
  %327 = vrot.lane.b32.xlu0 %v232, 112
  %v328 = vpop.permute.xlu0 %327
  %329 = vrot.lane.b32.xlu0 %v234, 112
  %v330 = vpop.permute.xlu0 %329
  %331 = vrot.lane.b32.xlu0 %v233, 112
  %v332 = vpop.permute.xlu0 %331
  %333 = vrot.lane.b32.xlu0 %v235, 112
  %v334 = vpop.permute.xlu0 %333
  %vm335 = vcmp.lt.s32.totalorder %v198, 112
  %v336 = vsel %vm335, %v328, %v332
  %v337 = vsel %vm335, %v330, %v334
  %v338 = vsel %vm335, %v332, %v328
  %v339 = vsel %vm335, %v334, %v330
  %340 = vst [vmem:[#allocation2 + $0xc0] sm:$0xff] %v336
  %341 = vst [vmem:[#allocation2 + $0xc8] sm:$0xff] %v338
  %342 = vst [vmem:[#allocation2 + $0xd0] sm:$0xff] %v337
  %343 = vst [vmem:[#allocation2 + $0xd8] sm:$0xff] %v339
  %344 = vrot.lane.b32.xlu0 %v193, 112
  %v345 = vpop.permute.xlu0 %344
  %346 = vrot.lane.b32.xlu0 %v195, 112
  %v347 = vpop.permute.xlu0 %346
  %348 = vrot.lane.b32.xlu0 %v194, 112
  %v349 = vpop.permute.xlu0 %348
  %350 = vrot.lane.b32.xlu0 %v196, 112
  %v351 = vpop.permute.xlu0 %350
  %v352 = vsel %vm335, %v345, %v349
  %v353 = vsel %vm335, %v347, %v351
  %v354 = vsel %vm335, %v349, %v345
  %v355 = vsel %vm335, %v351, %v347
  %356 = vst [vmem:[#allocation2 + $0xe0] sm:$0xff] %v352
  %357 = vst [vmem:[#allocation2 + $0xe8] sm:$0xff] %v354
  %358 = vst [vmem:[#allocation2 + $0xf0] sm:$0xff] %v353
  %359 = vst [vmem:[#allocation2 + $0xf8] sm:$0xff] %v355
  %360 = vrot.lane.b32.xlu0 %v262, 112
  %v361 = vpop.permute.xlu0 %360
  %362 = vrot.lane.b32.xlu0 %v264, 112
  %v363 = vpop.permute.xlu0 %362
  %364 = vrot.lane.b32.xlu0 %v263, 112
  %v365 = vpop.permute.xlu0 %364
  %366 = vrot.lane.b32.xlu0 %v265, 112
  %v367 = vpop.permute.xlu0 %366
  %v368 = vsel %vm335, %v361, %v365
  %v369 = vsel %vm335, %v363, %v367
  %v370 = vsel %vm335, %v365, %v361
  %v371 = vsel %vm335, %v367, %v363
  %372 = vst [vmem:[#allocation2 + $0x100] sm:$0xff] %v368
  %373 = vst [vmem:[#allocation2 + $0x108] sm:$0xff] %v370
  %374 = vst [vmem:[#allocation2 + $0x110] sm:$0xff] %v369
  %375 = vst [vmem:[#allocation2 + $0x118] sm:$0xff] %v371
  %376 = vst [vmem:[#allocation2 + $0x120] sm:$0xff] %v40
  %377 = vst [vmem:[#allocation2 + $0x128] sm:$0xff] %v41
  %378 = vst [vmem:[#allocation2 + $0x130] sm:$0xff] %v42
  %379 = vst [vmem:[#allocation2 + $0x138] sm:$0xff] %v43
  %v380 = vld [vmem:[#allocation2] sm:$0xff]
  %v381 = vld [vmem:[#allocation2 + $0x8] sm:$0xff]
  %v382 = vld [vmem:[#allocation2 + $0x10] sm:$0xff]
  %v383 = vld [vmem:[#allocation2 + $0x18] sm:$0xff]
  %v384 = vld [vmem:[#allocation2 + $0x20] sm:$0xff]
  %v385 = vld [vmem:[#allocation2 + $0x28] sm:$0xff]
  %v386 = vld [vmem:[#allocation2 + $0x30] sm:$0xff]
  %v387 = vld [vmem:[#allocation2 + $0x38] sm:$0xff]
  %v388 = vld [vmem:[#allocation2 + $0x40] sm:$0xff]
  %v389 = vld [vmem:[#allocation2 + $0x48] sm:$0xff]
  %v390 = vld [vmem:[#allocation2 + $0x50] sm:$0xff]
  %v391 = vld [vmem:[#allocation2 + $0x58] sm:$0xff]
  %v392 = vld [vmem:[#allocation2 + $0x60] sm:$0xff]
  %v393 = vld [vmem:[#allocation2 + $0x68] sm:$0xff]
  %v394 = vld [vmem:[#allocation2 + $0x70] sm:$0xff]
  %v395 = vld [vmem:[#allocation2 + $0x78] sm:$0xff]
  %v396 = vld [vmem:[#allocation2 + $0x80] sm:$0xff]
  %v397 = vld [vmem:[#allocation2 + $0x88] sm:$0xff]
  %v398 = vld [vmem:[#allocation2 + $0x90] sm:$0xff]
  %v399 = vld [vmem:[#allocation2 + $0x98] sm:$0xff]
  %v400 = vld [vmem:[#allocation2 + $0xa0] sm:$0xff]
  %v401 = vld [vmem:[#allocation2 + $0xa8] sm:$0xff]
  %v402 = vld [vmem:[#allocation2 + $0xb0] sm:$0xff]
  %v403 = vld [vmem:[#allocation2 + $0xb8] sm:$0xff]
  %v404 = vld [vmem:[#allocation2 + $0xc0] sm:$0xff]
  %v405 = vld [vmem:[#allocation2 + $0xc8] sm:$0xff]
  %v406 = vld [vmem:[#allocation2 + $0xd0] sm:$0xff]
  %v407 = vld [vmem:[#allocation2 + $0xd8] sm:$0xff]
  %v408 = vld [vmem:[#allocation2 + $0xe0] sm:$0xff]
  %v409 = vld [vmem:[#allocation2 + $0xe8] sm:$0xff]
  %v410 = vld [vmem:[#allocation2 + $0xf0] sm:$0xff]
  %v411 = vld [vmem:[#allocation2 + $0xf8] sm:$0xff]
  %v412 = vld [vmem:[#allocation2 + $0x100] sm:$0xff]
  %v413 = vld [vmem:[#allocation2 + $0x108] sm:$0xff]
  %v414 = vld [vmem:[#allocation2 + $0x110] sm:$0xff]
  %v415 = vld [vmem:[#allocation2 + $0x118] sm:$0xff]
  %v416 = vld [vmem:[#allocation2 + $0x120] sm:$0xff]
  %v417 = vld [vmem:[#allocation2 + $0x128] sm:$0xff]
  %v418 = vld [vmem:[#allocation2 + $0x130] sm:$0xff]
  %v419 = vld [vmem:[#allocation2 + $0x138] sm:$0xff]
  %421 = vset.pattern.permute.xlu0 0
  %422 = vperm.xlu0 %421, %v35
  %v423 = vpop.permute.xlu0 %422
  %426 = vset.pattern.permute.xlu0 0
  %427 = vperm.xlu0 %426, %v36
  %v428 = vpop.permute.xlu0 %427
  %v431 = vsel %vm58, %v18, 0
  %v434 = vsel %vm58, %v20, 0
  %436 = vmatpush.msra.mxu0 %v410
  %437 = vmatpush.msra.mxu0 %v408
  %438 = vmatpush.msra.mxu0 %v406
  %439 = vmatpush.msra.mxu0 %v404
  %440 = vmatpush.msra.mxu0 %v402
  %441 = vmatpush.msra.mxu0 %v400
  %442 = vmatpush.msra.mxu0 %v398
  %443 = vmatpush.msra.mxu0 %v396
  %444 = vmatpush.msra.mxu0 %v394
  %445 = vmatpush.msra.mxu0 %v392
  %446 = vmatpush.msra.mxu0 %v390
  %447 = vmatpush.msra.mxu0 %v388
  %448 = vmatpush.msra.mxu0 %v386
  %449 = vmatpush.msra.mxu0 %v384
  %450 = vmatpush.msra.mxu0 %v382
  %451 = vmatpush.msra.mxu0 %v380
  %452 = vmatmul.f32.gmra.mxu0 %v17
  %v453 = vpop.f32.mrf.mxu0
  %v454 = vadd.f32 %v423, %v453
  %455 = vmatmul.f32.gmra.mxu0 %v19
  %v456 = vpop.f32.mrf.mxu0
  %v457 = vadd.f32 %v428, %v456
  %458 = vdwg.mxu0
  %459 = vmatpush.msra.mxu0 0.0
  %460 = vmatpush.msra.mxu0 0.0
  %461 = vmatpush.msra.mxu0 0.0
  %462 = vmatpush.msra.mxu0 0.0
  %463 = vmatpush.msra.mxu0 0.0
  %464 = vmatpush.msra.mxu0 0.0
  %465 = vmatpush.msra.mxu0 0.0
  %466 = vmatpush.msra.mxu0 0.0
  %467 = vmatpush.msra.mxu0 0.0
  %468 = vmatpush.msra.mxu0 0.0
  %469 = vmatpush.msra.mxu0 0.0
  %470 = vmatpush.msra.mxu0 0.0
  %471 = vmatpush.msra.mxu0 %v418
  %472 = vmatpush.msra.mxu0 %v416
  %473 = vmatpush.msra.mxu0 %v414
  %474 = vmatpush.msra.mxu0 %v412
  %475 = vmatmul.f32.gmra.mxu0 %v431
  %v476 = vpop.f32.mrf.mxu0
  %v477 = vadd.f32 %v454, %v476
  %478 = vmatmul.f32.gmra.mxu0 %v434
  %v479 = vpop.f32.mrf.mxu0
  %v480 = vadd.f32 %v457, %v479
  %481 = vdwg.mxu0
  %482 = vmatpush.msra.mxu0 %v411
  %483 = vmatpush.msra.mxu0 %v409
  %484 = vmatpush.msra.mxu0 %v407
  %485 = vmatpush.msra.mxu0 %v405
  %486 = vmatpush.msra.mxu0 %v403
  %487 = vmatpush.msra.mxu0 %v401
  %488 = vmatpush.msra.mxu0 %v399
  %489 = vmatpush.msra.mxu0 %v397
  %490 = vmatpush.msra.mxu0 %v395
  %491 = vmatpush.msra.mxu0 %v393
  %492 = vmatpush.msra.mxu0 %v391
  %493 = vmatpush.msra.mxu0 %v389
  %494 = vmatpush.msra.mxu0 %v387
  %495 = vmatpush.msra.mxu0 %v385
  %496 = vmatpush.msra.mxu0 %v383
  %497 = vmatpush.msra.mxu0 %v381
  %498 = vmatmul.f32.gmra.mxu0 %v17
  %v499 = vpop.f32.mrf.mxu0
  %v500 = vadd.f32 %v423, %v499
  %501 = vmatmul.f32.gmra.mxu0 %v19
  %v502 = vpop.f32.mrf.mxu0
  %v503 = vadd.f32 %v428, %v502
  %504 = vdwg.mxu0
  %505 = vmatpush.msra.mxu0 0.0
  %506 = vmatpush.msra.mxu0 0.0
  %507 = vmatpush.msra.mxu0 0.0
  %508 = vmatpush.msra.mxu0 0.0
  %509 = vmatpush.msra.mxu0 0.0
  %510 = vmatpush.msra.mxu0 0.0
  %511 = vmatpush.msra.mxu0 0.0
  %512 = vmatpush.msra.mxu0 0.0
  %513 = vmatpush.msra.mxu0 0.0
  %514 = vmatpush.msra.mxu0 0.0
  %515 = vmatpush.msra.mxu0 0.0
  %516 = vmatpush.msra.mxu0 0.0
  %517 = vmatpush.msra.mxu0 %v419
  %518 = vmatpush.msra.mxu0 %v417
  %519 = vmatpush.msra.mxu0 %v415
  %520 = vmatpush.msra.mxu0 %v413
  %521 = vmatmul.f32.gmra.mxu0 %v431
  %v522 = vpop.f32.mrf.mxu0
  %v523 = vadd.f32 %v500, %v522
  %524 = vmatmul.f32.gmra.mxu0 %v434
  %v525 = vpop.f32.mrf.mxu0
  %v526 = vadd.f32 %v503, %v525
  %527 = vdwg.mxu0
  %v528 = vadd.f32 %v477, %v62
  %v529 = vadd.f32 %v523, %v62
  %v530 = vmul.f32 %v528, 0.5
  %v531 = vmul.f32 %v529, 0.5
  %v532 = vmul.f32 %v528, 0.044715
  %v533 = vmul.f32 %v529, 0.044715
  %v534 = vmul.f32 %v532, %v528
  %v535 = vmul.f32 %v533, %v529
  %v536 = vmul.f32 %v534, %v528
  %v537 = vmul.f32 %v535, %v529
  %v538 = vadd.f32 %v528, %v536
  %v539 = vadd.f32 %v529, %v537
  %v540 = vmul.f32 %v538, 0.7978846
  %v541 = vmul.f32 %v539, 0.7978846
  %v542 = vtanh.pop %v540
  %v543 = vtanh.pop %v541
  %v544 = vadd.f32 %v542, 1.0
  %v545 = vadd.f32 %v543, 1.0
  %v546 = vmul.f32 %v530, %v544
  %v547 = vmul.f32 %v531, %v545
  %v548 = vadd.f32 %v546, %v66
  %v549 = vadd.f32 %v547, %v66
  %v550 = vmul.f32 %v548, 0.5
  %v551 = vmul.f32 %v549, 0.5
  %v552 = vmul.f32 %v548, 0.044715
  %v553 = vmul.f32 %v549, 0.044715
  %v554 = vmul.f32 %v552, %v548
  %v555 = vmul.f32 %v553, %v549
  %v556 = vmul.f32 %v554, %v548
  %v557 = vmul.f32 %v555, %v549
  %v558 = vadd.f32 %v548, %v556
  %v559 = vadd.f32 %v549, %v557
  %v560 = vmul.f32 %v558, 0.7978846
  %v561 = vmul.f32 %v559, 0.7978846
  %v562 = vtanh.pop %v560
  %v563 = vtanh.pop %v561
  %v564 = vadd.f32 %v562, 1.0
  %v565 = vadd.f32 %v563, 1.0
  %v566 = vmul.f32 %v550, %v564
  %v567 = vmul.f32 %v551, %v565
  %v568 = vadd.f32 %v566, %v567
  %569 = vadd.xlane.f32.xlu0 %v568
  %v570 = vpop.xlane.xlu0 %569
  %v571 = vrot.slane %v570, 4
  %v572 = vadd.f32 %v570, %v571
  %v573 = vrot.slane %v572, 2
  %v574 = vadd.f32 %v572, %v573
  %v575 = vrot.slane %v574, 1
  %v576 = vadd.f32 %v574, %v575
  %s577 = vtos %v576
  %v578 = vstv %s577
  %v579 = vmul.f32 %v566, %v566
  %v580 = vmul.f32 %v567, %v567
  %v581 = vadd.f32 %v579, %v580
  %582 = vadd.xlane.f32.xlu0 %v581
  %v583 = vpop.xlane.xlu0 %582
  %v584 = vrot.slane %v583, 4
  %v585 = vadd.f32 %v583, %v584
  %v586 = vrot.slane %v585, 2
  %v587 = vadd.f32 %v585, %v586
  %v588 = vrot.slane %v587, 1
  %v589 = vadd.f32 %v587, %v588
  %s590 = vtos %v589
  %v591 = vstv %s590
  %v592 = vrcp.pop 2048.0
  %v593 = vmul.f32 2048.0, %v592
  %v594 = vsub.f32 1.0, %v593
  %v595 = vmul.f32 %v592, %v594
  %v596 = vadd.f32 %v592, %v595
  %vm597 = vweird.f32 %v592
  %v598 = vsel %vm597, %v592, %v596
  %v599 = vmul.f32 %v578, %v598
  %v600 = vmul.f32 %v591, %v598
  %v601 = vmul.f32 %v599, %v599
  %v602 = vsub.f32 %v600, %v601
  %v603 = vadd.f32 %v602, 1e-05
  %v604 = vrsqrt.pop %v603
  %v605 = vmul.f32 %v604, %v603
  %v606 = vmul.f32 %v605, %v604
  %v607 = vmul.f32 0.5, %v606
  %v608 = vsub.f32 1.5, %v607
  %v609 = vmul.f32 %v604, %v608
  %vm610 = vweird.f32 %v603
  %vm611 = vweird.f32 %v604
  %vm612 = vmor %vm610, %vm611
  %v613 = vsel %vm612, %v604, %v609
  %v614 = vsub.f32 %v566, %v599
  %v615 = vsub.f32 %v567, %v599
  %v616 = vmul.f32 %v613, %v37
  %618 = vset.pattern.permute.xlu0 0
  %619 = vperm.xlu0 %618, %v616
  %v620 = vpop.permute.xlu0 %619
  %v622 = vmul.f32 %v614, %v620
  %v623 = vmul.f32 %v615, %v620
  %625 = vset.pattern.permute.xlu0 0
  %626 = vperm.xlu0 %625, %v38
  %v627 = vpop.permute.xlu0 %626
  %v629 = vadd.f32 %v622, %v627
  %v630 = vadd.f32 %v623, %v627
  %v631 = vmul.f32 %v629, 0.5
  %v632 = vmul.f32 %v630, 0.5
  %v633 = vmul.f32 %v629, 0.044715
  %v634 = vmul.f32 %v630, 0.044715
  %v635 = vmul.f32 %v633, %v629
  %v636 = vmul.f32 %v634, %v630
  %v637 = vmul.f32 %v635, %v629
  %v638 = vmul.f32 %v636, %v630
  %v639 = vadd.f32 %v629, %v637
  %v640 = vadd.f32 %v630, %v638
  %v641 = vmul.f32 %v639, 0.7978846
  %v642 = vmul.f32 %v640, 0.7978846
  %v643 = vtanh.pop %v641
  %v644 = vtanh.pop %v642
  %v645 = vadd.f32 %v643, 1.0
  %v646 = vadd.f32 %v644, 1.0
  %v647 = vmul.f32 %v631, %v645
  %v648 = vmul.f32 %v632, %v646
  %649 = vrot.lane.b32.xlu0 %v647, 113
  %v650 = vpop.permute.xlu0 %649
  %651 = vrot.lane.b32.xlu0 %v648, 113
  %v652 = vpop.permute.xlu0 %651
  %v653 = vsel %vm214, %v650, %v652
  %v654 = vsel %vm214, %v652, %v650
  %655 = vrot.lane.b32.xlu0 %v647, 1
  %v656 = vpop.permute.xlu0 %655
  %657 = vrot.lane.b32.xlu0 %v648, 1
  %v658 = vpop.permute.xlu0 %657
  %v659 = vsel %vm227, %v656, %v658
  %v660 = vsel %vm227, %v658, %v656
  %v661 = vsel %vm202, %v653, %v660
  %v662 = vsel %vm203, %v654, %v659
  %663 = vrot.lane.b32.xlu0 %v647, 15
  %v664 = vpop.permute.xlu0 %663
  %665 = vrot.lane.b32.xlu0 %v648, 15
  %v666 = vpop.permute.xlu0 %665
  %v667 = vsel %vm244, %v664, %v666
  %v668 = vsel %vm244, %v666, %v664
  %669 = vrot.lane.b32.xlu0 %v647, 127
  %v670 = vpop.permute.xlu0 %669
  %671 = vrot.lane.b32.xlu0 %v648, 127
  %v672 = vpop.permute.xlu0 %671
  %v673 = vsel %vm257, %v670, %v672
  %v674 = vsel %vm257, %v672, %v670
  %v675 = vsel %vm204, %v668, %v673
  %v676 = vsel %vm205, %v667, %v674
  %677 = vrot.lane.b32.xlu0 %v661, 16
  %v678 = vpop.permute.xlu0 %677
  %679 = vrot.lane.b32.xlu0 %v662, 16
  %v680 = vpop.permute.xlu0 %679
  %v681 = vsel %vm274, %v678, %v680
  %v682 = vsel %vm274, %v680, %v678
  %683 = vst [vmem:[#allocation2] sm:$0xff] %v682
  %684 = vst [vmem:[#allocation2 + $0x8] sm:$0xff] %v681
  %685 = vrot.lane.b32.xlu0 %v647, 16
  %v686 = vpop.permute.xlu0 %685
  %687 = vrot.lane.b32.xlu0 %v648, 16
  %v688 = vpop.permute.xlu0 %687
  %v689 = vsel %vm274, %v686, %v688
  %v690 = vsel %vm274, %v688, %v686
  %691 = vst [vmem:[#allocation2 + $0x10] sm:$0xff] %v690
  %692 = vst [vmem:[#allocation2 + $0x18] sm:$0xff] %v689
  %693 = vrot.lane.b32.xlu0 %v675, 16
  %v694 = vpop.permute.xlu0 %693
  %695 = vrot.lane.b32.xlu0 %v676, 16
  %v696 = vpop.permute.xlu0 %695
  %v697 = vsel %vm274, %v694, %v696
  %v698 = vsel %vm274, %v696, %v694
  %699 = vst [vmem:[#allocation2 + $0x20] sm:$0xff] %v698
  %700 = vst [vmem:[#allocation2 + $0x28] sm:$0xff] %v697
  %701 = vst [vmem:[#allocation2 + $0x30] sm:$0xff] %v661
  %702 = vst [vmem:[#allocation2 + $0x38] sm:$0xff] %v662
  %703 = vst [vmem:[#allocation2 + $0x40] sm:$0xff] %v647
  %704 = vst [vmem:[#allocation2 + $0x48] sm:$0xff] %v648
  %705 = vst [vmem:[#allocation2 + $0x50] sm:$0xff] %v675
  %706 = vst [vmem:[#allocation2 + $0x58] sm:$0xff] %v676
  %707 = vrot.lane.b32.xlu0 %v661, 112
  %v708 = vpop.permute.xlu0 %707
  %709 = vrot.lane.b32.xlu0 %v662, 112
  %v710 = vpop.permute.xlu0 %709
  %v711 = vsel %vm335, %v708, %v710
  %v712 = vsel %vm335, %v710, %v708
  %713 = vst [vmem:[#allocation2 + $0x60] sm:$0xff] %v711
  %714 = vst [vmem:[#allocation2 + $0x68] sm:$0xff] %v712
  %715 = vrot.lane.b32.xlu0 %v647, 112
  %v716 = vpop.permute.xlu0 %715
  %717 = vrot.lane.b32.xlu0 %v648, 112
  %v718 = vpop.permute.xlu0 %717
  %v719 = vsel %vm335, %v716, %v718
  %v720 = vsel %vm335, %v718, %v716
  %721 = vst [vmem:[#allocation2 + $0x70] sm:$0xff] %v719
  %722 = vst [vmem:[#allocation2 + $0x78] sm:$0xff] %v720
  %723 = vrot.lane.b32.xlu0 %v675, 112
  %v724 = vpop.permute.xlu0 %723
  %725 = vrot.lane.b32.xlu0 %v676, 112
  %v726 = vpop.permute.xlu0 %725
  %v727 = vsel %vm335, %v724, %v726
  %v728 = vsel %vm335, %v726, %v724
  %729 = vst [vmem:[#allocation2 + $0x80] sm:$0xff] %v727
  %730 = vst [vmem:[#allocation2 + $0x88] sm:$0xff] %v728
  %v731 = vld [vmem:[#allocation2] sm:$0xff]
  %v732 = vld [vmem:[#allocation2 + $0x8] sm:$0xff]
  %v733 = vld [vmem:[#allocation2 + $0x10] sm:$0xff]
  %v734 = vld [vmem:[#allocation2 + $0x18] sm:$0xff]
  %v735 = vld [vmem:[#allocation2 + $0x20] sm:$0xff]
  %v736 = vld [vmem:[#allocation2 + $0x28] sm:$0xff]
  %v737 = vld [vmem:[#allocation2 + $0x30] sm:$0xff]
  %v738 = vld [vmem:[#allocation2 + $0x38] sm:$0xff]
  %v739 = vld [vmem:[#allocation2 + $0x40] sm:$0xff]
  %v740 = vld [vmem:[#allocation2 + $0x48] sm:$0xff]
  %v741 = vld [vmem:[#allocation2 + $0x50] sm:$0xff]
  %v742 = vld [vmem:[#allocation2 + $0x58] sm:$0xff]
  %v743 = vld [vmem:[#allocation2 + $0x60] sm:$0xff]
  %v744 = vld [vmem:[#allocation2 + $0x68] sm:$0xff]
  %v745 = vld [vmem:[#allocation2 + $0x70] sm:$0xff]
  %v746 = vld [vmem:[#allocation2 + $0x78] sm:$0xff]
  %v747 = vld [vmem:[#allocation2 + $0x80] sm:$0xff]
  %v748 = vld [vmem:[#allocation2 + $0x88] sm:$0xff]
  %v749 = vld [vmem:[#allocation2 + $0x90] sm:$0xff]
  %v750 = vld [vmem:[#allocation2 + $0x98] sm:$0xff]
  %v751 = vld [vmem:[#allocation2 + $0xa0] sm:$0xff]
  %v752 = vld [vmem:[#allocation2 + $0xa8] sm:$0xff]
  %v753 = vld [vmem:[#allocation2 + $0xb0] sm:$0xff]
  %v754 = vld [vmem:[#allocation2 + $0xb8] sm:$0xff]
  %v755 = vld [vmem:[#allocation2 + $0xc0] sm:$0xff]
  %v756 = vld [vmem:[#allocation2 + $0xc8] sm:$0xff]
  %v757 = vld [vmem:[#allocation2 + $0xd0] sm:$0xff]
  %v758 = vld [vmem:[#allocation2 + $0xd8] sm:$0xff]
  %v759 = vld [vmem:[#allocation2 + $0xe0] sm:$0xff]
  %v760 = vld [vmem:[#allocation2 + $0xe8] sm:$0xff]
  %v761 = vld [vmem:[#allocation2 + $0xf0] sm:$0xff]
  %v762 = vld [vmem:[#allocation2 + $0xf8] sm:$0xff]
  %v763 = vld [vmem:[#allocation2 + $0x100] sm:$0xff]
  %v764 = vld [vmem:[#allocation2 + $0x108] sm:$0xff]
  %v765 = vld [vmem:[#allocation2 + $0x110] sm:$0xff]
  %v766 = vld [vmem:[#allocation2 + $0x118] sm:$0xff]
  %v767 = vld [vmem:[#allocation2 + $0x120] sm:$0xff]
  %v768 = vld [vmem:[#allocation2 + $0x128] sm:$0xff]
  %v769 = vld [vmem:[#allocation2 + $0x130] sm:$0xff]
  %v770 = vld [vmem:[#allocation2 + $0x138] sm:$0xff]
  %772 = vset.pattern.permute.xlu0 0
  %773 = vperm.xlu0 %772, %v39
  %v774 = vpop.permute.xlu0 %773
  %v777 = vsel %vm58, %v22, 0
  %779 = vmatpush.msra.mxu0 %v761
  %780 = vmatpush.msra.mxu0 %v759
  %781 = vmatpush.msra.mxu0 %v757
  %782 = vmatpush.msra.mxu0 %v755
  %783 = vmatpush.msra.mxu0 %v753
  %784 = vmatpush.msra.mxu0 %v751
  %785 = vmatpush.msra.mxu0 %v749
  %786 = vmatpush.msra.mxu0 %v747
  %787 = vmatpush.msra.mxu0 %v745
  %788 = vmatpush.msra.mxu0 %v743
  %789 = vmatpush.msra.mxu0 %v741
  %790 = vmatpush.msra.mxu0 %v739
  %791 = vmatpush.msra.mxu0 %v737
  %792 = vmatpush.msra.mxu0 %v735
  %793 = vmatpush.msra.mxu0 %v733
  %794 = vmatpush.msra.mxu0 %v731
  %795 = vmatmul.f32.gmra.mxu0 %v21
  %v796 = vpop.f32.mrf.mxu0
  %v797 = vadd.f32 %v774, %v796
  %798 = vdwg.mxu0
  %799 = vmatpush.msra.mxu0 0.0
  %800 = vmatpush.msra.mxu0 0.0
  %801 = vmatpush.msra.mxu0 0.0
  %802 = vmatpush.msra.mxu0 0.0
  %803 = vmatpush.msra.mxu0 0.0
  %804 = vmatpush.msra.mxu0 0.0
  %805 = vmatpush.msra.mxu0 0.0
  %806 = vmatpush.msra.mxu0 0.0
  %807 = vmatpush.msra.mxu0 0.0
  %808 = vmatpush.msra.mxu0 0.0
  %809 = vmatpush.msra.mxu0 0.0
  %810 = vmatpush.msra.mxu0 0.0
  %811 = vmatpush.msra.mxu0 %v769
  %812 = vmatpush.msra.mxu0 %v767
  %813 = vmatpush.msra.mxu0 %v765
  %814 = vmatpush.msra.mxu0 %v763
  %815 = vmatmul.f32.gmra.mxu0 %v777
  %v816 = vpop.f32.mrf.mxu0
  %v817 = vadd.f32 %v797, %v816
  %818 = vdwg.mxu0
  %819 = vmatpush.msra.mxu0 %v762
  %820 = vmatpush.msra.mxu0 %v760
  %821 = vmatpush.msra.mxu0 %v758
  %822 = vmatpush.msra.mxu0 %v756
  %823 = vmatpush.msra.mxu0 %v754
  %824 = vmatpush.msra.mxu0 %v752
  %825 = vmatpush.msra.mxu0 %v750
  %826 = vmatpush.msra.mxu0 %v748
  %827 = vmatpush.msra.mxu0 %v746
  %828 = vmatpush.msra.mxu0 %v744
  %829 = vmatpush.msra.mxu0 %v742
  %830 = vmatpush.msra.mxu0 %v740
  %831 = vmatpush.msra.mxu0 %v738
  %832 = vmatpush.msra.mxu0 %v736
  %833 = vmatpush.msra.mxu0 %v734
  %834 = vmatpush.msra.mxu0 %v732
  %835 = vmatmul.f32.gmra.mxu0 %v21
  %v836 = vpop.f32.mrf.mxu0
  %v837 = vadd.f32 %v774, %v836
  %838 = vdwg.mxu0
  %839 = vmatpush.msra.mxu0 0.0
  %840 = vmatpush.msra.mxu0 0.0
  %841 = vmatpush.msra.mxu0 0.0
  %842 = vmatpush.msra.mxu0 0.0
  %843 = vmatpush.msra.mxu0 0.0
  %844 = vmatpush.msra.mxu0 0.0
  %845 = vmatpush.msra.mxu0 0.0
  %846 = vmatpush.msra.mxu0 0.0
  %847 = vmatpush.msra.mxu0 0.0
  %848 = vmatpush.msra.mxu0 0.0
  %849 = vmatpush.msra.mxu0 0.0
  %850 = vmatpush.msra.mxu0 0.0
  %851 = vmatpush.msra.mxu0 %v770
  %852 = vmatpush.msra.mxu0 %v768
  %853 = vmatpush.msra.mxu0 %v766
  %854 = vmatpush.msra.mxu0 %v764
  %855 = vmatmul.f32.gmra.mxu0 %v777
  %v856 = vpop.f32.mrf.mxu0
  %v857 = vadd.f32 %v837, %v856
  %858 = vdwg.mxu0
  %v859 = vadd.f32 %v817, %v70
  %v860 = vadd.f32 %v857, %v70
  %v861 = vmul.f32 %v859, 0.5
  %v862 = vmul.f32 %v860, 0.5
  %v863 = vmul.f32 %v859, 0.044715
  %v864 = vmul.f32 %v860, 0.044715
  %v865 = vmul.f32 %v863, %v859
  %v866 = vmul.f32 %v864, %v860
  %v867 = vmul.f32 %v865, %v859
  %v868 = vmul.f32 %v866, %v860
  %v869 = vadd.f32 %v859, %v867
  %v870 = vadd.f32 %v860, %v868
  %v871 = vmul.f32 %v869, 0.7978846
  %v872 = vmul.f32 %v870, 0.7978846
  %v873 = vtanh.pop %v871
  %v874 = vtanh.pop %v872
  %v875 = vadd.f32 %v873, 1.0
  %v876 = vadd.f32 %v874, 1.0
  %v877 = vmul.f32 %v861, %v875
  %v878 = vmul.f32 %v862, %v876
  %v879 = vadd.f32 %v877, %v74
  %v880 = vadd.f32 %v878, %v74
  %v881 = vmul.f32 %v879, 0.5
  %v882 = vmul.f32 %v880, 0.5
  %v883 = vmul.f32 %v879, 0.044715
  %v884 = vmul.f32 %v880, 0.044715
  %v885 = vmul.f32 %v883, %v879
  %v886 = vmul.f32 %v884, %v880
  %v887 = vmul.f32 %v885, %v879
  %v888 = vmul.f32 %v886, %v880
  %v889 = vadd.f32 %v879, %v887
  %v890 = vadd.f32 %v880, %v888
  %v891 = vmul.f32 %v889, 0.7978846
  %v892 = vmul.f32 %v890, 0.7978846
  %v893 = vtanh.pop %v891
  %v894 = vtanh.pop %v892
  %v895 = vadd.f32 %v893, 1.0
  %v896 = vadd.f32 %v894, 1.0
  %v897 = vmul.f32 %v881, %v895
  %v898 = vmul.f32 %v882, %v896
  %v899 = vadd.f32 %v897, %v480
  %v900 = vadd.f32 %v898, %v526
  %901 = vst [vmem:[%s4] sm:$0xff] %v899
  %902 = vst [vmem:[%s4 + $0x8] sm:$0xff] %v900
  %s903 = scalar_lea.vmem %s0, 32
  %v904 = vld [vmem:[%s903] sm:$0xff]
  %v905 = vld [vmem:[%s903 + $0x8] sm:$0xff]
  %v906 = vld [vmem:[%s903 + $0x10] sm:$0xff]
  %v907 = vld [vmem:[%s903 + $0x18] sm:$0xff]
  %s908 = scalar_lea.vmem %s1, 2
  %v909 = vld [vmem:[%s908] sm:$0x3]
  %v911 = vperm.slane %v909, 0
  %v912 = vperm.slane %v909, 1
  %v915 = vmul.f32 %v23, %v911
  %v916 = vmul.f32 %v24, %v912
  %v917 = vmul.f32 %v25, %v911
  %v918 = vmul.f32 %v26, %v912
  %v919 = vmul.f32 %v27, %v911
  %v920 = vmul.f32 %v28, %v912
  %v921 = vmul.f32 %v29, %v911
  %v922 = vmul.f32 %v30, %v912
  %v923 = vsel %vm58, %v916, 0.0
  %v924 = vadd.f32 %v915, %v923
  %925 = vadd.xlane.f32.xlu0 %v924
  %v926 = vpop.xlane.xlu0 %925
  %v927 = vsel %vm58, %v918, 0.0
  %v928 = vadd.f32 %v917, %v927
  %929 = vadd.xlane.f32.xlu0 %v928
  %v930 = vpop.xlane.xlu0 %929
  %v931 = vsel %vm58, %v920, 0.0
  %v932 = vadd.f32 %v919, %v931
  %933 = vadd.xlane.f32.xlu0 %v932
  %v934 = vpop.xlane.xlu0 %933
  %v935 = vsel %vm58, %v922, 0.0
  %v936 = vadd.f32 %v921, %v935
  %937 = vadd.xlane.f32.xlu0 %v936
  %v938 = vpop.xlane.xlu0 %937
  %v939 = vadd.f32 %v904, %v905
  %v940 = vadd.f32 %v939, %v906
  %v941 = vadd.f32 %v940, %v907
  %942 = vadd.xlane.f32.xlu0 %v941
  %v943 = vpop.xlane.xlu0 %942
  %v944 = vrot.slane %v943, 4
  %v945 = vadd.f32 %v943, %v944
  %v946 = vrot.slane %v945, 2
  %v947 = vadd.f32 %v945, %v946
  %v948 = vrot.slane %v947, 1
  %v949 = vadd.f32 %v947, %v948
  %s950 = vtos %v949
  %v951 = vstv %s950
  %v952 = vmul.f32 %v904, %v904
  %v953 = vmul.f32 %v905, %v905
  %v954 = vmul.f32 %v906, %v906
  %v955 = vmul.f32 %v907, %v907
  %v956 = vadd.f32 %v952, %v953
  %v957 = vadd.f32 %v956, %v954
  %v958 = vadd.f32 %v957, %v955
  %959 = vadd.xlane.f32.xlu0 %v958
  %v960 = vpop.xlane.xlu0 %959
  %v961 = vrot.slane %v960, 4
  %v962 = vadd.f32 %v960, %v961
  %v963 = vrot.slane %v962, 2
  %v964 = vadd.f32 %v962, %v963
  %v965 = vrot.slane %v964, 1
  %v966 = vadd.f32 %v964, %v965
  %s967 = vtos %v966
  %v968 = vstv %s967
  %v969 = vmul.f32 %v951, %v111
  %v970 = vmul.f32 %v968, %v111
  %v971 = vmul.f32 %v969, %v969
  %v972 = vsub.f32 %v970, %v971
  %v973 = vadd.f32 %v972, 1e-05
  %v974 = vrsqrt.pop %v973
  %v975 = vmul.f32 %v974, %v973
  %v976 = vmul.f32 %v975, %v974
  %v977 = vmul.f32 0.5, %v976
  %v978 = vsub.f32 1.5, %v977
  %v979 = vmul.f32 %v974, %v978
  %vm980 = vweird.f32 %v973
  %vm981 = vweird.f32 %v974
  %vm982 = vmor %vm980, %vm981
  %v983 = vsel %vm982, %v974, %v979
  %v984 = vsub.f32 %v904, %v969
  %v985 = vsub.f32 %v905, %v969
  %v986 = vsub.f32 %v906, %v969
  %v987 = vsub.f32 %v907, %v969
  %v988 = vmul.f32 %v983, %v31
  %v989 = vmul.f32 %v983, %v32
  %991 = vset.pattern.permute.xlu0 0
  %992 = vperm.xlu0 %991, %v988
  %v993 = vpop.permute.xlu0 %992
  %996 = vset.pattern.permute.xlu0 0
  %997 = vperm.xlu0 %996, %v989
  %v998 = vpop.permute.xlu0 %997
  %v1000 = vmul.f32 %v984, %v993
  %v1001 = vmul.f32 %v985, %v993
  %v1002 = vmul.f32 %v986, %v998
  %v1003 = vmul.f32 %v987, %v998
  %v1004 = vadd.f32 %v1000, %v150
  %v1005 = vadd.f32 %v1001, %v150
  %v1006 = vadd.f32 %v1002, %v155
  %v1007 = vadd.f32 %v1003, %v155
  %v1008 = vmul.f32 %v1004, 0.5
  %v1009 = vmul.f32 %v1005, 0.5
  %v1010 = vmul.f32 %v1006, 0.5
  %v1011 = vmul.f32 %v1007, 0.5
  %v1012 = vmul.f32 %v1004, 0.044715
  %v1013 = vmul.f32 %v1005, 0.044715
  %v1014 = vmul.f32 %v1006, 0.044715
  %v1015 = vmul.f32 %v1007, 0.044715
  %v1016 = vmul.f32 %v1012, %v1004
  %v1017 = vmul.f32 %v1013, %v1005
  %v1018 = vmul.f32 %v1014, %v1006
  %v1019 = vmul.f32 %v1015, %v1007
  %v1020 = vmul.f32 %v1016, %v1004
  %v1021 = vmul.f32 %v1017, %v1005
  %v1022 = vmul.f32 %v1018, %v1006
  %v1023 = vmul.f32 %v1019, %v1007
  %v1024 = vadd.f32 %v1004, %v1020
  %v1025 = vadd.f32 %v1005, %v1021
  %v1026 = vadd.f32 %v1006, %v1022
  %v1027 = vadd.f32 %v1007, %v1023
  %v1028 = vmul.f32 %v1024, 0.7978846
  %v1029 = vmul.f32 %v1025, 0.7978846
  %v1030 = vmul.f32 %v1026, 0.7978846
  %v1031 = vmul.f32 %v1027, 0.7978846
  %v1032 = vtanh.pop %v1028
  %v1033 = vtanh.pop %v1029
  %v1034 = vtanh.pop %v1030
  %v1035 = vtanh.pop %v1031
  %v1036 = vadd.f32 %v1032, 1.0
  %v1037 = vadd.f32 %v1033, 1.0
  %v1038 = vadd.f32 %v1034, 1.0
  %v1039 = vadd.f32 %v1035, 1.0
  %v1040 = vmul.f32 %v1008, %v1036
  %v1041 = vmul.f32 %v1009, %v1037
  %v1042 = vmul.f32 %v1010, %v1038
  %v1043 = vmul.f32 %v1011, %v1039
  %1044 = vrot.lane.b32.xlu0 %v1040, 113
  %v1045 = vpop.permute.xlu0 %1044
  %1046 = vrot.lane.b32.xlu0 %v1042, 113
  %v1047 = vpop.permute.xlu0 %1046
  %1048 = vrot.lane.b32.xlu0 %v1041, 113
  %v1049 = vpop.permute.xlu0 %1048
  %1050 = vrot.lane.b32.xlu0 %v1043, 113
  %v1051 = vpop.permute.xlu0 %1050
  %v1052 = vsel %vm214, %v1045, %v1049
  %v1053 = vsel %vm214, %v1047, %v1051
  %v1054 = vsel %vm214, %v1049, %v1045
  %v1055 = vsel %vm214, %v1051, %v1047
  %1056 = vrot.lane.b32.xlu0 %v1040, 1
  %v1057 = vpop.permute.xlu0 %1056
  %1058 = vrot.lane.b32.xlu0 %v1042, 1
  %v1059 = vpop.permute.xlu0 %1058
  %1060 = vrot.lane.b32.xlu0 %v1041, 1
  %v1061 = vpop.permute.xlu0 %1060
  %1062 = vrot.lane.b32.xlu0 %v1043, 1
  %v1063 = vpop.permute.xlu0 %1062
  %v1064 = vsel %vm227, %v1057, %v1061
  %v1065 = vsel %vm227, %v1059, %v1063
  %v1066 = vsel %vm227, %v1061, %v1057
  %v1067 = vsel %vm227, %v1063, %v1059
  %v1068 = vsel %vm202, %v1052, %v1066
  %v1069 = vsel %vm203, %v1054, %v1064
  %v1070 = vsel %vm202, %v1053, %v1067
  %v1071 = vsel %vm203, %v1055, %v1065
  %1072 = vrot.lane.b32.xlu0 %v1040, 15
  %v1073 = vpop.permute.xlu0 %1072
  %1074 = vrot.lane.b32.xlu0 %v1042, 15
  %v1075 = vpop.permute.xlu0 %1074
  %1076 = vrot.lane.b32.xlu0 %v1041, 15
  %v1077 = vpop.permute.xlu0 %1076
  %1078 = vrot.lane.b32.xlu0 %v1043, 15
  %v1079 = vpop.permute.xlu0 %1078
  %v1080 = vsel %vm244, %v1073, %v1077
  %v1081 = vsel %vm244, %v1075, %v1079
  %v1082 = vsel %vm244, %v1077, %v1073
  %v1083 = vsel %vm244, %v1079, %v1075
  %1084 = vrot.lane.b32.xlu0 %v1040, 127
  %v1085 = vpop.permute.xlu0 %1084
  %1086 = vrot.lane.b32.xlu0 %v1042, 127
  %v1087 = vpop.permute.xlu0 %1086
  %1088 = vrot.lane.b32.xlu0 %v1041, 127
  %v1089 = vpop.permute.xlu0 %1088
  %1090 = vrot.lane.b32.xlu0 %v1043, 127
  %v1091 = vpop.permute.xlu0 %1090
  %v1092 = vsel %vm257, %v1085, %v1089
  %v1093 = vsel %vm257, %v1087, %v1091
  %v1094 = vsel %vm257, %v1089, %v1085
  %v1095 = vsel %vm257, %v1091, %v1087
  %v1096 = vsel %vm204, %v1082, %v1092
  %v1097 = vsel %vm205, %v1080, %v1094
  %v1098 = vsel %vm204, %v1083, %v1093
  %v1099 = vsel %vm205, %v1081, %v1095
  %1100 = vrot.lane.b32.xlu0 %v1068, 16
  %v1101 = vpop.permute.xlu0 %1100
  %1102 = vrot.lane.b32.xlu0 %v1070, 16
  %v1103 = vpop.permute.xlu0 %1102
  %1104 = vrot.lane.b32.xlu0 %v1069, 16
  %v1105 = vpop.permute.xlu0 %1104
  %1106 = vrot.lane.b32.xlu0 %v1071, 16
  %v1107 = vpop.permute.xlu0 %1106
  %v1108 = vsel %vm274, %v1101, %v1105
  %v1109 = vsel %vm274, %v1103, %v1107
  %v1110 = vsel %vm274, %v1105, %v1101
  %v1111 = vsel %vm274, %v1107, %v1103
  %1112 = vst [vmem:[#allocation2] sm:$0xff] %v1110
  %1113 = vst [vmem:[#allocation2 + $0x8] sm:$0xff] %v1108
  %1114 = vst [vmem:[#allocation2 + $0x10] sm:$0xff] %v1111
  %1115 = vst [vmem:[#allocation2 + $0x18] sm:$0xff] %v1109
  %1116 = vrot.lane.b32.xlu0 %v1040, 16
  %v1117 = vpop.permute.xlu0 %1116
  %1118 = vrot.lane.b32.xlu0 %v1042, 16
  %v1119 = vpop.permute.xlu0 %1118
  %1120 = vrot.lane.b32.xlu0 %v1041, 16
  %v1121 = vpop.permute.xlu0 %1120
  %1122 = vrot.lane.b32.xlu0 %v1043, 16
  %v1123 = vpop.permute.xlu0 %1122
  %v1124 = vsel %vm274, %v1117, %v1121
  %v1125 = vsel %vm274, %v1119, %v1123
  %v1126 = vsel %vm274, %v1121, %v1117
  %v1127 = vsel %vm274, %v1123, %v1119
  %1128 = vst [vmem:[#allocation2 + $0x20] sm:$0xff] %v1126
  %1129 = vst [vmem:[#allocation2 + $0x28] sm:$0xff] %v1124
  %1130 = vst [vmem:[#allocation2 + $0x30] sm:$0xff] %v1127
  %1131 = vst [vmem:[#allocation2 + $0x38] sm:$0xff] %v1125
  %1132 = vrot.lane.b32.xlu0 %v1096, 16
  %v1133 = vpop.permute.xlu0 %1132
  %1134 = vrot.lane.b32.xlu0 %v1098, 16
  %v1135 = vpop.permute.xlu0 %1134
  %1136 = vrot.lane.b32.xlu0 %v1097, 16
  %v1137 = vpop.permute.xlu0 %1136
  %1138 = vrot.lane.b32.xlu0 %v1099, 16
  %v1139 = vpop.permute.xlu0 %1138
  %v1140 = vsel %vm274, %v1133, %v1137
  %v1141 = vsel %vm274, %v1135, %v1139
  %v1142 = vsel %vm274, %v1137, %v1133
  %v1143 = vsel %vm274, %v1139, %v1135
  %1144 = vst [vmem:[#allocation2 + $0x40] sm:$0xff] %v1142
  %1145 = vst [vmem:[#allocation2 + $0x48] sm:$0xff] %v1140
  %1146 = vst [vmem:[#allocation2 + $0x50] sm:$0xff] %v1143
  %1147 = vst [vmem:[#allocation2 + $0x58] sm:$0xff] %v1141
  %1148 = vst [vmem:[#allocation2 + $0x60] sm:$0xff] %v1068
  %1149 = vst [vmem:[#allocation2 + $0x68] sm:$0xff] %v1069
  %1150 = vst [vmem:[#allocation2 + $0x70] sm:$0xff] %v1070
  %1151 = vst [vmem:[#allocation2 + $0x78] sm:$0xff] %v1071
  %1152 = vst [vmem:[#allocation2 + $0x80] sm:$0xff] %v1040
  %1153 = vst [vmem:[#allocation2 + $0x88] sm:$0xff] %v1041
  %1154 = vst [vmem:[#allocation2 + $0x90] sm:$0xff] %v1042
  %1155 = vst [vmem:[#allocation2 + $0x98] sm:$0xff] %v1043
  %1156 = vst [vmem:[#allocation2 + $0xa0] sm:$0xff] %v1096
  %1157 = vst [vmem:[#allocation2 + $0xa8] sm:$0xff] %v1097
  %1158 = vst [vmem:[#allocation2 + $0xb0] sm:$0xff] %v1098
  %1159 = vst [vmem:[#allocation2 + $0xb8] sm:$0xff] %v1099
  %1160 = vrot.lane.b32.xlu0 %v1068, 112
  %v1161 = vpop.permute.xlu0 %1160
  %1162 = vrot.lane.b32.xlu0 %v1070, 112
  %v1163 = vpop.permute.xlu0 %1162
  %1164 = vrot.lane.b32.xlu0 %v1069, 112
  %v1165 = vpop.permute.xlu0 %1164
  %1166 = vrot.lane.b32.xlu0 %v1071, 112
  %v1167 = vpop.permute.xlu0 %1166
  %v1168 = vsel %vm335, %v1161, %v1165
  %v1169 = vsel %vm335, %v1163, %v1167
  %v1170 = vsel %vm335, %v1165, %v1161
  %v1171 = vsel %vm335, %v1167, %v1163
  %1172 = vst [vmem:[#allocation2 + $0xc0] sm:$0xff] %v1168
  %1173 = vst [vmem:[#allocation2 + $0xc8] sm:$0xff] %v1170
  %1174 = vst [vmem:[#allocation2 + $0xd0] sm:$0xff] %v1169
  %1175 = vst [vmem:[#allocation2 + $0xd8] sm:$0xff] %v1171
  %1176 = vrot.lane.b32.xlu0 %v1040, 112
  %v1177 = vpop.permute.xlu0 %1176
  %1178 = vrot.lane.b32.xlu0 %v1042, 112
  %v1179 = vpop.permute.xlu0 %1178
  %1180 = vrot.lane.b32.xlu0 %v1041, 112
  %v1181 = vpop.permute.xlu0 %1180
  %1182 = vrot.lane.b32.xlu0 %v1043, 112
  %v1183 = vpop.permute.xlu0 %1182
  %v1184 = vsel %vm335, %v1177, %v1181
  %v1185 = vsel %vm335, %v1179, %v1183
  %v1186 = vsel %vm335, %v1181, %v1177
  %v1187 = vsel %vm335, %v1183, %v1179
  %1188 = vst [vmem:[#allocation2 + $0xe0] sm:$0xff] %v1184
  %1189 = vst [vmem:[#allocation2 + $0xe8] sm:$0xff] %v1186
  %1190 = vst [vmem:[#allocation2 + $0xf0] sm:$0xff] %v1185
  %1191 = vst [vmem:[#allocation2 + $0xf8] sm:$0xff] %v1187
  %1192 = vrot.lane.b32.xlu0 %v1096, 112
  %v1193 = vpop.permute.xlu0 %1192
  %1194 = vrot.lane.b32.xlu0 %v1098, 112
  %v1195 = vpop.permute.xlu0 %1194
  %1196 = vrot.lane.b32.xlu0 %v1097, 112
  %v1197 = vpop.permute.xlu0 %1196
  %1198 = vrot.lane.b32.xlu0 %v1099, 112
  %v1199 = vpop.permute.xlu0 %1198
  %v1200 = vsel %vm335, %v1193, %v1197
  %v1201 = vsel %vm335, %v1195, %v1199
  %v1202 = vsel %vm335, %v1197, %v1193
  %v1203 = vsel %vm335, %v1199, %v1195
  %1204 = vst [vmem:[#allocation2 + $0x100] sm:$0xff] %v1200
  %1205 = vst [vmem:[#allocation2 + $0x108] sm:$0xff] %v1202
  %1206 = vst [vmem:[#allocation2 + $0x110] sm:$0xff] %v1201
  %1207 = vst [vmem:[#allocation2 + $0x118] sm:$0xff] %v1203
  %1208 = vst [vmem:[#allocation2 + $0x120] sm:$0xff] %v904
  %1209 = vst [vmem:[#allocation2 + $0x128] sm:$0xff] %v905
  %1210 = vst [vmem:[#allocation2 + $0x130] sm:$0xff] %v906
  %1211 = vst [vmem:[#allocation2 + $0x138] sm:$0xff] %v907
  %v1212 = vld [vmem:[#allocation2] sm:$0xff]
  %v1213 = vld [vmem:[#allocation2 + $0x8] sm:$0xff]
  %v1214 = vld [vmem:[#allocation2 + $0x10] sm:$0xff]
  %v1215 = vld [vmem:[#allocation2 + $0x18] sm:$0xff]
  %v1216 = vld [vmem:[#allocation2 + $0x20] sm:$0xff]
  %v1217 = vld [vmem:[#allocation2 + $0x28] sm:$0xff]
  %v1218 = vld [vmem:[#allocation2 + $0x30] sm:$0xff]
  %v1219 = vld [vmem:[#allocation2 + $0x38] sm:$0xff]
  %v1220 = vld [vmem:[#allocation2 + $0x40] sm:$0xff]
  %v1221 = vld [vmem:[#allocation2 + $0x48] sm:$0xff]
  %v1222 = vld [vmem:[#allocation2 + $0x50] sm:$0xff]
  %v1223 = vld [vmem:[#allocation2 + $0x58] sm:$0xff]
  %v1224 = vld [vmem:[#allocation2 + $0x60] sm:$0xff]
  %v1225 = vld [vmem:[#allocation2 + $0x68] sm:$0xff]
  %v1226 = vld [vmem:[#allocation2 + $0x70] sm:$0xff]
  %v1227 = vld [vmem:[#allocation2 + $0x78] sm:$0xff]
  %v1228 = vld [vmem:[#allocation2 + $0x80] sm:$0xff]
  %v1229 = vld [vmem:[#allocation2 + $0x88] sm:$0xff]
  %v1230 = vld [vmem:[#allocation2 + $0x90] sm:$0xff]
  %v1231 = vld [vmem:[#allocation2 + $0x98] sm:$0xff]
  %v1232 = vld [vmem:[#allocation2 + $0xa0] sm:$0xff]
  %v1233 = vld [vmem:[#allocation2 + $0xa8] sm:$0xff]
  %v1234 = vld [vmem:[#allocation2 + $0xb0] sm:$0xff]
  %v1235 = vld [vmem:[#allocation2 + $0xb8] sm:$0xff]
  %v1236 = vld [vmem:[#allocation2 + $0xc0] sm:$0xff]
  %v1237 = vld [vmem:[#allocation2 + $0xc8] sm:$0xff]
  %v1238 = vld [vmem:[#allocation2 + $0xd0] sm:$0xff]
  %v1239 = vld [vmem:[#allocation2 + $0xd8] sm:$0xff]
  %v1240 = vld [vmem:[#allocation2 + $0xe0] sm:$0xff]
  %v1241 = vld [vmem:[#allocation2 + $0xe8] sm:$0xff]
  %v1242 = vld [vmem:[#allocation2 + $0xf0] sm:$0xff]
  %v1243 = vld [vmem:[#allocation2 + $0xf8] sm:$0xff]
  %v1244 = vld [vmem:[#allocation2 + $0x100] sm:$0xff]
  %v1245 = vld [vmem:[#allocation2 + $0x108] sm:$0xff]
  %v1246 = vld [vmem:[#allocation2 + $0x110] sm:$0xff]
  %v1247 = vld [vmem:[#allocation2 + $0x118] sm:$0xff]
  %v1248 = vld [vmem:[#allocation2 + $0x120] sm:$0xff]
  %v1249 = vld [vmem:[#allocation2 + $0x128] sm:$0xff]
  %v1250 = vld [vmem:[#allocation2 + $0x130] sm:$0xff]
  %v1251 = vld [vmem:[#allocation2 + $0x138] sm:$0xff]
  %1252 = vmatpush.msra.mxu0 %v1242
  %1253 = vmatpush.msra.mxu0 %v1240
  %1254 = vmatpush.msra.mxu0 %v1238
  %1255 = vmatpush.msra.mxu0 %v1236
  %1256 = vmatpush.msra.mxu0 %v1234
  %1257 = vmatpush.msra.mxu0 %v1232
  %1258 = vmatpush.msra.mxu0 %v1230
  %1259 = vmatpush.msra.mxu0 %v1228
  %1260 = vmatpush.msra.mxu0 %v1226
  %1261 = vmatpush.msra.mxu0 %v1224
  %1262 = vmatpush.msra.mxu0 %v1222
  %1263 = vmatpush.msra.mxu0 %v1220
  %1264 = vmatpush.msra.mxu0 %v1218
  %1265 = vmatpush.msra.mxu0 %v1216
  %1266 = vmatpush.msra.mxu0 %v1214
  %1267 = vmatpush.msra.mxu0 %v1212
  %1268 = vmatmul.f32.gmra.mxu0 %v17
  %v1269 = vpop.f32.mrf.mxu0
  %v1270 = vadd.f32 %v423, %v1269
  %1271 = vmatmul.f32.gmra.mxu0 %v19
  %v1272 = vpop.f32.mrf.mxu0
  %v1273 = vadd.f32 %v428, %v1272
  %1274 = vdwg.mxu0
  %1275 = vmatpush.msra.mxu0 0.0
  %1276 = vmatpush.msra.mxu0 0.0
  %1277 = vmatpush.msra.mxu0 0.0
  %1278 = vmatpush.msra.mxu0 0.0
  %1279 = vmatpush.msra.mxu0 0.0
  %1280 = vmatpush.msra.mxu0 0.0
  %1281 = vmatpush.msra.mxu0 0.0
  %1282 = vmatpush.msra.mxu0 0.0
  %1283 = vmatpush.msra.mxu0 0.0
  %1284 = vmatpush.msra.mxu0 0.0
  %1285 = vmatpush.msra.mxu0 0.0
  %1286 = vmatpush.msra.mxu0 0.0
  %1287 = vmatpush.msra.mxu0 %v1250
  %1288 = vmatpush.msra.mxu0 %v1248
  %1289 = vmatpush.msra.mxu0 %v1246
  %1290 = vmatpush.msra.mxu0 %v1244
  %1291 = vmatmul.f32.gmra.mxu0 %v431
  %v1292 = vpop.f32.mrf.mxu0
  %v1293 = vadd.f32 %v1270, %v1292
  %1294 = vmatmul.f32.gmra.mxu0 %v434
  %v1295 = vpop.f32.mrf.mxu0
  %v1296 = vadd.f32 %v1273, %v1295
  %1297 = vdwg.mxu0
  %1298 = vmatpush.msra.mxu0 %v1243
  %1299 = vmatpush.msra.mxu0 %v1241
  %1300 = vmatpush.msra.mxu0 %v1239
  %1301 = vmatpush.msra.mxu0 %v1237
  %1302 = vmatpush.msra.mxu0 %v1235
  %1303 = vmatpush.msra.mxu0 %v1233
  %1304 = vmatpush.msra.mxu0 %v1231
  %1305 = vmatpush.msra.mxu0 %v1229
  %1306 = vmatpush.msra.mxu0 %v1227
  %1307 = vmatpush.msra.mxu0 %v1225
  %1308 = vmatpush.msra.mxu0 %v1223
  %1309 = vmatpush.msra.mxu0 %v1221
  %1310 = vmatpush.msra.mxu0 %v1219
  %1311 = vmatpush.msra.mxu0 %v1217
  %1312 = vmatpush.msra.mxu0 %v1215
  %1313 = vmatpush.msra.mxu0 %v1213
  %1314 = vmatmul.f32.gmra.mxu0 %v17
  %v1315 = vpop.f32.mrf.mxu0
  %v1316 = vadd.f32 %v423, %v1315
  %1317 = vmatmul.f32.gmra.mxu0 %v19
  %v1318 = vpop.f32.mrf.mxu0
  %v1319 = vadd.f32 %v428, %v1318
  %1320 = vdwg.mxu0
  %1321 = vmatpush.msra.mxu0 0.0
  %1322 = vmatpush.msra.mxu0 0.0
  %1323 = vmatpush.msra.mxu0 0.0
  %1324 = vmatpush.msra.mxu0 0.0
  %1325 = vmatpush.msra.mxu0 0.0
  %1326 = vmatpush.msra.mxu0 0.0
  %1327 = vmatpush.msra.mxu0 0.0
  %1328 = vmatpush.msra.mxu0 0.0
  %1329 = vmatpush.msra.mxu0 0.0
  %1330 = vmatpush.msra.mxu0 0.0
  %1331 = vmatpush.msra.mxu0 0.0
  %1332 = vmatpush.msra.mxu0 0.0
  %1333 = vmatpush.msra.mxu0 %v1251
  %1334 = vmatpush.msra.mxu0 %v1249
  %1335 = vmatpush.msra.mxu0 %v1247
  %1336 = vmatpush.msra.mxu0 %v1245
  %1337 = vmatmul.f32.gmra.mxu0 %v431
  %v1338 = vpop.f32.mrf.mxu0
  %v1339 = vadd.f32 %v1316, %v1338
  %1340 = vmatmul.f32.gmra.mxu0 %v434
  %v1341 = vpop.f32.mrf.mxu0
  %v1342 = vadd.f32 %v1319, %v1341
  %1343 = vdwg.mxu0
  %v1344 = vadd.f32 %v1293, %v926
  %v1345 = vadd.f32 %v1339, %v926
  %v1346 = vmul.f32 %v1344, 0.5
  %v1347 = vmul.f32 %v1345, 0.5
  %v1348 = vmul.f32 %v1344, 0.044715
  %v1349 = vmul.f32 %v1345, 0.044715
  %v1350 = vmul.f32 %v1348, %v1344
  %v1351 = vmul.f32 %v1349, %v1345
  %v1352 = vmul.f32 %v1350, %v1344
  %v1353 = vmul.f32 %v1351, %v1345
  %v1354 = vadd.f32 %v1344, %v1352
  %v1355 = vadd.f32 %v1345, %v1353
  %v1356 = vmul.f32 %v1354, 0.7978846
  %v1357 = vmul.f32 %v1355, 0.7978846
  %v1358 = vtanh.pop %v1356
  %v1359 = vtanh.pop %v1357
  %v1360 = vadd.f32 %v1358, 1.0
  %v1361 = vadd.f32 %v1359, 1.0
  %v1362 = vmul.f32 %v1346, %v1360
  %v1363 = vmul.f32 %v1347, %v1361
  %v1364 = vadd.f32 %v1362, %v930
  %v1365 = vadd.f32 %v1363, %v930
  %v1366 = vmul.f32 %v1364, 0.5
  %v1367 = vmul.f32 %v1365, 0.5
  %v1368 = vmul.f32 %v1364, 0.044715
  %v1369 = vmul.f32 %v1365, 0.044715
  %v1370 = vmul.f32 %v1368, %v1364
  %v1371 = vmul.f32 %v1369, %v1365
  %v1372 = vmul.f32 %v1370, %v1364
  %v1373 = vmul.f32 %v1371, %v1365
  %v1374 = vadd.f32 %v1364, %v1372
  %v1375 = vadd.f32 %v1365, %v1373
  %v1376 = vmul.f32 %v1374, 0.7978846
  %v1377 = vmul.f32 %v1375, 0.7978846
  %v1378 = vtanh.pop %v1376
  %v1379 = vtanh.pop %v1377
  %v1380 = vadd.f32 %v1378, 1.0
  %v1381 = vadd.f32 %v1379, 1.0
  %v1382 = vmul.f32 %v1366, %v1380
  %v1383 = vmul.f32 %v1367, %v1381
  %v1384 = vadd.f32 %v1382, %v1383
  %1385 = vadd.xlane.f32.xlu0 %v1384
  %v1386 = vpop.xlane.xlu0 %1385
  %v1387 = vrot.slane %v1386, 4
  %v1388 = vadd.f32 %v1386, %v1387
  %v1389 = vrot.slane %v1388, 2
  %v1390 = vadd.f32 %v1388, %v1389
  %v1391 = vrot.slane %v1390, 1
  %v1392 = vadd.f32 %v1390, %v1391
  %s1393 = vtos %v1392
  %v1394 = vstv %s1393
  %v1395 = vmul.f32 %v1382, %v1382
  %v1396 = vmul.f32 %v1383, %v1383
  %v1397 = vadd.f32 %v1395, %v1396
  %1398 = vadd.xlane.f32.xlu0 %v1397
  %v1399 = vpop.xlane.xlu0 %1398
  %v1400 = vrot.slane %v1399, 4
  %v1401 = vadd.f32 %v1399, %v1400
  %v1402 = vrot.slane %v1401, 2
  %v1403 = vadd.f32 %v1401, %v1402
  %v1404 = vrot.slane %v1403, 1
  %v1405 = vadd.f32 %v1403, %v1404
  %s1406 = vtos %v1405
  %v1407 = vstv %s1406
  %v1408 = vmul.f32 %v1394, %v598
  %v1409 = vmul.f32 %v1407, %v598
  %v1410 = vmul.f32 %v1408, %v1408
  %v1411 = vsub.f32 %v1409, %v1410
  %v1412 = vadd.f32 %v1411, 1e-05
  %v1413 = vrsqrt.pop %v1412
  %v1414 = vmul.f32 %v1413, %v1412
  %v1415 = vmul.f32 %v1414, %v1413
  %v1416 = vmul.f32 0.5, %v1415
  %v1417 = vsub.f32 1.5, %v1416
  %v1418 = vmul.f32 %v1413, %v1417
  %vm1419 = vweird.f32 %v1412
  %vm1420 = vweird.f32 %v1413
  %vm1421 = vmor %vm1419, %vm1420
  %v1422 = vsel %vm1421, %v1413, %v1418
  %v1423 = vsub.f32 %v1382, %v1408
  %v1424 = vsub.f32 %v1383, %v1408
  %v1425 = vmul.f32 %v1422, %v37
  %1427 = vset.pattern.permute.xlu0 0
  %1428 = vperm.xlu0 %1427, %v1425
  %v1429 = vpop.permute.xlu0 %1428
  %v1431 = vmul.f32 %v1423, %v1429
  %v1432 = vmul.f32 %v1424, %v1429
  %v1433 = vadd.f32 %v1431, %v627
  %v1434 = vadd.f32 %v1432, %v627
  %v1435 = vmul.f32 %v1433, 0.5
  %v1436 = vmul.f32 %v1434, 0.5
  %v1437 = vmul.f32 %v1433, 0.044715
  %v1438 = vmul.f32 %v1434, 0.044715
  %v1439 = vmul.f32 %v1437, %v1433
  %v1440 = vmul.f32 %v1438, %v1434
  %v1441 = vmul.f32 %v1439, %v1433
  %v1442 = vmul.f32 %v1440, %v1434
  %v1443 = vadd.f32 %v1433, %v1441
  %v1444 = vadd.f32 %v1434, %v1442
  %v1445 = vmul.f32 %v1443, 0.7978846
  %v1446 = vmul.f32 %v1444, 0.7978846
  %v1447 = vtanh.pop %v1445
  %v1448 = vtanh.pop %v1446
  %v1449 = vadd.f32 %v1447, 1.0
  %v1450 = vadd.f32 %v1448, 1.0
  %v1451 = vmul.f32 %v1435, %v1449
  %v1452 = vmul.f32 %v1436, %v1450
  %1453 = vrot.lane.b32.xlu0 %v1451, 113
  %v1454 = vpop.permute.xlu0 %1453
  %1455 = vrot.lane.b32.xlu0 %v1452, 113
  %v1456 = vpop.permute.xlu0 %1455
  %v1457 = vsel %vm214, %v1454, %v1456
  %v1458 = vsel %vm214, %v1456, %v1454
  %1459 = vrot.lane.b32.xlu0 %v1451, 1
  %v1460 = vpop.permute.xlu0 %1459
  %1461 = vrot.lane.b32.xlu0 %v1452, 1
  %v1462 = vpop.permute.xlu0 %1461
  %v1463 = vsel %vm227, %v1460, %v1462
  %v1464 = vsel %vm227, %v1462, %v1460
  %v1465 = vsel %vm202, %v1457, %v1464
  %v1466 = vsel %vm203, %v1458, %v1463
  %1467 = vrot.lane.b32.xlu0 %v1451, 15
  %v1468 = vpop.permute.xlu0 %1467
  %1469 = vrot.lane.b32.xlu0 %v1452, 15
  %v1470 = vpop.permute.xlu0 %1469
  %v1471 = vsel %vm244, %v1468, %v1470
  %v1472 = vsel %vm244, %v1470, %v1468
  %1473 = vrot.lane.b32.xlu0 %v1451, 127
  %v1474 = vpop.permute.xlu0 %1473
  %1475 = vrot.lane.b32.xlu0 %v1452, 127
  %v1476 = vpop.permute.xlu0 %1475
  %v1477 = vsel %vm257, %v1474, %v1476
  %v1478 = vsel %vm257, %v1476, %v1474
  %v1479 = vsel %vm204, %v1472, %v1477
  %v1480 = vsel %vm205, %v1471, %v1478
  %1481 = vrot.lane.b32.xlu0 %v1465, 16
  %v1482 = vpop.permute.xlu0 %1481
  %1483 = vrot.lane.b32.xlu0 %v1466, 16
  %v1484 = vpop.permute.xlu0 %1483
  %v1485 = vsel %vm274, %v1482, %v1484
  %v1486 = vsel %vm274, %v1484, %v1482
  %1487 = vst [vmem:[#allocation2] sm:$0xff] %v1486
  %1488 = vst [vmem:[#allocation2 + $0x8] sm:$0xff] %v1485
  %1489 = vrot.lane.b32.xlu0 %v1451, 16
  %v1490 = vpop.permute.xlu0 %1489
  %1491 = vrot.lane.b32.xlu0 %v1452, 16
  %v1492 = vpop.permute.xlu0 %1491
  %v1493 = vsel %vm274, %v1490, %v1492
  %v1494 = vsel %vm274, %v1492, %v1490
  %1495 = vst [vmem:[#allocation2 + $0x10] sm:$0xff] %v1494
  %1496 = vst [vmem:[#allocation2 + $0x18] sm:$0xff] %v1493
  %1497 = vrot.lane.b32.xlu0 %v1479, 16
  %v1498 = vpop.permute.xlu0 %1497
  %1499 = vrot.lane.b32.xlu0 %v1480, 16
  %v1500 = vpop.permute.xlu0 %1499
  %v1501 = vsel %vm274, %v1498, %v1500
  %v1502 = vsel %vm274, %v1500, %v1498
  %1503 = vst [vmem:[#allocation2 + $0x20] sm:$0xff] %v1502
  %1504 = vst [vmem:[#allocation2 + $0x28] sm:$0xff] %v1501
  %1505 = vst [vmem:[#allocation2 + $0x30] sm:$0xff] %v1465
  %1506 = vst [vmem:[#allocation2 + $0x38] sm:$0xff] %v1466
  %1507 = vst [vmem:[#allocation2 + $0x40] sm:$0xff] %v1451
  %1508 = vst [vmem:[#allocation2 + $0x48] sm:$0xff] %v1452
  %1509 = vst [vmem:[#allocation2 + $0x50] sm:$0xff] %v1479
  %1510 = vst [vmem:[#allocation2 + $0x58] sm:$0xff] %v1480
  %1511 = vrot.lane.b32.xlu0 %v1465, 112
  %v1512 = vpop.permute.xlu0 %1511
  %1513 = vrot.lane.b32.xlu0 %v1466, 112
  %v1514 = vpop.permute.xlu0 %1513
  %v1515 = vsel %vm335, %v1512, %v1514
  %v1516 = vsel %vm335, %v1514, %v1512
  %1517 = vst [vmem:[#allocation2 + $0x60] sm:$0xff] %v1515
  %1518 = vst [vmem:[#allocation2 + $0x68] sm:$0xff] %v1516
  %1519 = vrot.lane.b32.xlu0 %v1451, 112
  %v1520 = vpop.permute.xlu0 %1519
  %1521 = vrot.lane.b32.xlu0 %v1452, 112
  %v1522 = vpop.permute.xlu0 %1521
  %v1523 = vsel %vm335, %v1520, %v1522
  %v1524 = vsel %vm335, %v1522, %v1520
  %1525 = vst [vmem:[#allocation2 + $0x70] sm:$0xff] %v1523
  %1526 = vst [vmem:[#allocation2 + $0x78] sm:$0xff] %v1524
  %1527 = vrot.lane.b32.xlu0 %v1479, 112
  %v1528 = vpop.permute.xlu0 %1527
  %1529 = vrot.lane.b32.xlu0 %v1480, 112
  %v1530 = vpop.permute.xlu0 %1529
  %v1531 = vsel %vm335, %v1528, %v1530
  %v1532 = vsel %vm335, %v1530, %v1528
  %1533 = vst [vmem:[#allocation2 + $0x80] sm:$0xff] %v1531
  %1534 = vst [vmem:[#allocation2 + $0x88] sm:$0xff] %v1532
  %v1535 = vld [vmem:[#allocation2] sm:$0xff]
  %v1536 = vld [vmem:[#allocation2 + $0x8] sm:$0xff]
  %v1537 = vld [vmem:[#allocation2 + $0x10] sm:$0xff]
  %v1538 = vld [vmem:[#allocation2 + $0x18] sm:$0xff]
  %v1539 = vld [vmem:[#allocation2 + $0x20] sm:$0xff]
  %v1540 = vld [vmem:[#allocation2 + $0x28] sm:$0xff]
  %v1541 = vld [vmem:[#allocation2 + $0x30] sm:$0xff]
  %v1542 = vld [vmem:[#allocation2 + $0x38] sm:$0xff]
  %v1543 = vld [vmem:[#allocation2 + $0x40] sm:$0xff]
  %v1544 = vld [vmem:[#allocation2 + $0x48] sm:$0xff]
  %v1545 = vld [vmem:[#allocation2 + $0x50] sm:$0xff]
  %v1546 = vld [vmem:[#allocation2 + $0x58] sm:$0xff]
  %v1547 = vld [vmem:[#allocation2 + $0x60] sm:$0xff]
  %v1548 = vld [vmem:[#allocation2 + $0x68] sm:$0xff]
  %v1549 = vld [vmem:[#allocation2 + $0x70] sm:$0xff]
  %v1550 = vld [vmem:[#allocation2 + $0x78] sm:$0xff]
  %v1551 = vld [vmem:[#allocation2 + $0x80] sm:$0xff]
  %v1552 = vld [vmem:[#allocation2 + $0x88] sm:$0xff]
  %v1553 = vld [vmem:[#allocation2 + $0x90] sm:$0xff]
  %v1554 = vld [vmem:[#allocation2 + $0x98] sm:$0xff]
  %v1555 = vld [vmem:[#allocation2 + $0xa0] sm:$0xff]
  %v1556 = vld [vmem:[#allocation2 + $0xa8] sm:$0xff]
  %v1557 = vld [vmem:[#allocation2 + $0xb0] sm:$0xff]
  %v1558 = vld [vmem:[#allocation2 + $0xb8] sm:$0xff]
  %v1559 = vld [vmem:[#allocation2 + $0xc0] sm:$0xff]
  %v1560 = vld [vmem:[#allocation2 + $0xc8] sm:$0xff]
  %v1561 = vld [vmem:[#allocation2 + $0xd0] sm:$0xff]
  %v1562 = vld [vmem:[#allocation2 + $0xd8] sm:$0xff]
  %v1563 = vld [vmem:[#allocation2 + $0xe0] sm:$0xff]
  %v1564 = vld [vmem:[#allocation2 + $0xe8] sm:$0xff]
  %v1565 = vld [vmem:[#allocation2 + $0xf0] sm:$0xff]
  %v1566 = vld [vmem:[#allocation2 + $0xf8] sm:$0xff]
  %v1567 = vld [vmem:[#allocation2 + $0x100] sm:$0xff]
  %v1568 = vld [vmem:[#allocation2 + $0x108] sm:$0xff]
  %v1569 = vld [vmem:[#allocation2 + $0x110] sm:$0xff]
  %v1570 = vld [vmem:[#allocation2 + $0x118] sm:$0xff]
  %v1571 = vld [vmem:[#allocation2 + $0x120] sm:$0xff]
  %v1572 = vld [vmem:[#allocation2 + $0x128] sm:$0xff]
  %v1573 = vld [vmem:[#allocation2 + $0x130] sm:$0xff]
  %v1574 = vld [vmem:[#allocation2 + $0x138] sm:$0xff]
  %1575 = vmatpush.msra.mxu0 %v1565
  %1576 = vmatpush.msra.mxu0 %v1563
  %1577 = vmatpush.msra.mxu0 %v1561
  %1578 = vmatpush.msra.mxu0 %v1559
  %1579 = vmatpush.msra.mxu0 %v1557
  %1580 = vmatpush.msra.mxu0 %v1555
  %1581 = vmatpush.msra.mxu0 %v1553
  %1582 = vmatpush.msra.mxu0 %v1551
  %1583 = vmatpush.msra.mxu0 %v1549
  %1584 = vmatpush.msra.mxu0 %v1547
  %1585 = vmatpush.msra.mxu0 %v1545
  %1586 = vmatpush.msra.mxu0 %v1543
  %1587 = vmatpush.msra.mxu0 %v1541
  %1588 = vmatpush.msra.mxu0 %v1539
  %1589 = vmatpush.msra.mxu0 %v1537
  %1590 = vmatpush.msra.mxu0 %v1535
  %1591 = vmatmul.f32.gmra.mxu0 %v21
  %v1592 = vpop.f32.mrf.mxu0
  %v1593 = vadd.f32 %v774, %v1592
  %1594 = vdwg.mxu0
  %1595 = vmatpush.msra.mxu0 0.0
  %1596 = vmatpush.msra.mxu0 0.0
  %1597 = vmatpush.msra.mxu0 0.0
  %1598 = vmatpush.msra.mxu0 0.0
  %1599 = vmatpush.msra.mxu0 0.0
  %1600 = vmatpush.msra.mxu0 0.0
  %1601 = vmatpush.msra.mxu0 0.0
  %1602 = vmatpush.msra.mxu0 0.0
  %1603 = vmatpush.msra.mxu0 0.0
  %1604 = vmatpush.msra.mxu0 0.0
  %1605 = vmatpush.msra.mxu0 0.0
  %1606 = vmatpush.msra.mxu0 0.0
  %1607 = vmatpush.msra.mxu0 %v1573
  %1608 = vmatpush.msra.mxu0 %v1571
  %1609 = vmatpush.msra.mxu0 %v1569
  %1610 = vmatpush.msra.mxu0 %v1567
  %1611 = vmatmul.f32.gmra.mxu0 %v777
  %v1612 = vpop.f32.mrf.mxu0
  %v1613 = vadd.f32 %v1593, %v1612
  %1614 = vdwg.mxu0
  %1615 = vmatpush.msra.mxu0 %v1566
  %1616 = vmatpush.msra.mxu0 %v1564
  %1617 = vmatpush.msra.mxu0 %v1562
  %1618 = vmatpush.msra.mxu0 %v1560
  %1619 = vmatpush.msra.mxu0 %v1558
  %1620 = vmatpush.msra.mxu0 %v1556
  %1621 = vmatpush.msra.mxu0 %v1554
  %1622 = vmatpush.msra.mxu0 %v1552
  %1623 = vmatpush.msra.mxu0 %v1550
  %1624 = vmatpush.msra.mxu0 %v1548
  %1625 = vmatpush.msra.mxu0 %v1546
  %1626 = vmatpush.msra.mxu0 %v1544
  %1627 = vmatpush.msra.mxu0 %v1542
  %1628 = vmatpush.msra.mxu0 %v1540
  %1629 = vmatpush.msra.mxu0 %v1538
  %1630 = vmatpush.msra.mxu0 %v1536
  %1631 = vmatmul.f32.gmra.mxu0 %v21
  %v1632 = vpop.f32.mrf.mxu0
  %v1633 = vadd.f32 %v774, %v1632
  %1634 = vdwg.mxu0
  %1635 = vmatpush.msra.mxu0 0.0
  %1636 = vmatpush.msra.mxu0 0.0
  %1637 = vmatpush.msra.mxu0 0.0
  %1638 = vmatpush.msra.mxu0 0.0
  %1639 = vmatpush.msra.mxu0 0.0
  %1640 = vmatpush.msra.mxu0 0.0
  %1641 = vmatpush.msra.mxu0 0.0
  %1642 = vmatpush.msra.mxu0 0.0
  %1643 = vmatpush.msra.mxu0 0.0
  %1644 = vmatpush.msra.mxu0 0.0
  %1645 = vmatpush.msra.mxu0 0.0
  %1646 = vmatpush.msra.mxu0 0.0
  %1647 = vmatpush.msra.mxu0 %v1574
  %1648 = vmatpush.msra.mxu0 %v1572
  %1649 = vmatpush.msra.mxu0 %v1570
  %1650 = vmatpush.msra.mxu0 %v1568
  %1651 = vmatmul.f32.gmra.mxu0 %v777
  %v1652 = vpop.f32.mrf.mxu0
  %v1653 = vadd.f32 %v1633, %v1652
  %1654 = vdwg.mxu0
  %v1655 = vadd.f32 %v1613, %v934
  %v1656 = vadd.f32 %v1653, %v934
  %v1657 = vmul.f32 %v1655, 0.5
  %v1658 = vmul.f32 %v1656, 0.5
  %v1659 = vmul.f32 %v1655, 0.044715
  %v1660 = vmul.f32 %v1656, 0.044715
  %v1661 = vmul.f32 %v1659, %v1655
  %v1662 = vmul.f32 %v1660, %v1656
  %v1663 = vmul.f32 %v1661, %v1655
  %v1664 = vmul.f32 %v1662, %v1656
  %v1665 = vadd.f32 %v1655, %v1663
  %v1666 = vadd.f32 %v1656, %v1664
  %v1667 = vmul.f32 %v1665, 0.7978846
  %v1668 = vmul.f32 %v1666, 0.7978846
  %v1669 = vtanh.pop %v1667
  %v1670 = vtanh.pop %v1668
  %v1671 = vadd.f32 %v1669, 1.0
  %v1672 = vadd.f32 %v1670, 1.0
  %v1673 = vmul.f32 %v1657, %v1671
  %v1674 = vmul.f32 %v1658, %v1672
  %v1675 = vadd.f32 %v1673, %v938
  %v1676 = vadd.f32 %v1674, %v938
  %v1677 = vmul.f32 %v1675, 0.5
  %v1678 = vmul.f32 %v1676, 0.5
  %v1679 = vmul.f32 %v1675, 0.044715
  %v1680 = vmul.f32 %v1676, 0.044715
  %v1681 = vmul.f32 %v1679, %v1675
  %v1682 = vmul.f32 %v1680, %v1676
  %v1683 = vmul.f32 %v1681, %v1675
  %v1684 = vmul.f32 %v1682, %v1676
  %v1685 = vadd.f32 %v1675, %v1683
  %v1686 = vadd.f32 %v1676, %v1684
  %v1687 = vmul.f32 %v1685, 0.7978846
  %v1688 = vmul.f32 %v1686, 0.7978846
  %v1689 = vtanh.pop %v1687
  %v1690 = vtanh.pop %v1688
  %v1691 = vadd.f32 %v1689, 1.0
  %v1692 = vadd.f32 %v1690, 1.0
  %v1693 = vmul.f32 %v1677, %v1691
  %v1694 = vmul.f32 %v1678, %v1692
  %v1695 = vadd.f32 %v1693, %v1296
  %v1696 = vadd.f32 %v1694, %v1342
  %s1697 = scalar_lea.vmem %s4, 16
  %1698 = vst [vmem:[%s1697] sm:$0xff] %v1695
  %1699 = vst [vmem:[%s1697 + $0x8] sm:$0xff] %v1696
  // Predicated region
  $region18: #{upblock_forward.1} parent=0 // pred_check
    _
  $region19: #{upblock_forward.1} parent=0 // pred_check_branch
    %1701 = sbr.rel (0) target = $region21
  $region20: #{upblock_forward.1} parent=0 // pred_region
    _
  $region21: #{upblock_forward.1} parent=0 // pred_fallthru
    _
  // Predicated region
  $region22: #{upblock_forward.1} parent=0 // pred_check
    _
  $region23: #{upblock_forward.1} parent=0 // pred_check_branch
    %1703 = sbr.rel (0) target = $region25
  $region24: #{upblock_forward.1} parent=0 // pred_region
    _
  $region25: #{upblock_forward.1} parent=0 // pred_fallthru
    _

</llo_original>
